<compile_context>
chip_gen: v5e
topology: v5e:2x2
jax: 0.10.0
libtpu: 0.0.40
codegen_flags: <defaults>
</compile_context>

<pallas_src>
import jax
import jax.numpy as jnp
from jax import lax
from jax.experimental import pallas as pl
from jax.experimental.pallas import tpu as pltpu

# ---------------- model hyper-parameters (synthetic ModelSetup) ----------------
B = 2            # batch
C_IN = 3         # RGB
H = W = 32       # image spatial size (small synthetic)
C_FEAT = 32      # backbone.out_channels == fusing_channels
NUM_DIM = 16     # numerical clinical feature dim
EMB_DIM = 16     # gender embedding dim
CLIN_DIM = NUM_DIM + EMB_DIM   # clinical_input_channels (input to before_repeat)
BN_EPS = 1e-5
# setup: use_clinical=True, spatialise_clinical=True, spatialise_method='repeat',
#        fusion_strategy='add', fuse_depth=1, using_fpn=False, fusion_residule=False

HO1, WO1 = H // 2, W // 2        # 16,16  backbone conv output spatial (3x3, s2, p1)
HO2, WO2 = HO1 // 2, WO1 // 2    # 8,8    fuse conv output spatial
K1 = 9 * C_IN                    # 27
K1_PAD = 32                      # pad contraction dim for aligned tiles
K2 = 9 * C_FEAT                  # 288


def _per_step_batch():
    """Images per grid step.

    v7x has 2 TensorCores per chip: keep one image per grid step and let the
    "parallel" batch grid shard across cores.  Single-TC v5e/v6e: fold the whole
    batch into one grid step (bigger MXU M, no serial per-step overhead).
    """
    try:
        kind = jax.devices()[0].device_kind.lower()
    except Exception:
        return B
    return 1 if "v7" in kind else B


BB = _per_step_batch()           # images per grid step


# ================================ Pallas kernel ================================

def _fused_rcnn_kernel(patches_ref, w1_ref, w2_ref, par_ref, o_ref, pad_ref):
    """backbone conv(+bias+ReLU) -> 'repeat'+'add' clinical fusion ->
    fuse_convs[0] conv + folded eval-mode BN + ReLU, all VMEM-resident.

    patches_ref: [bb, 2, 2, HO1//2, WO1//2, K1_PAD]  stage-1 im2col rows grouped
                 by the parity of the *padded* stage-1 output row/col.
    w1_ref:      [K1_PAD, C_FEAT]   backbone conv weight (zero-padded K rows)
    w2_ref:      [K2, C_FEAT]       fuse conv weight, rows ordered (dy, dx, cin)
    par_ref:     [bb, 4, C_FEAT]    rows: 0=conv1 bias, 1=clinical row,
                                          2=BN scale, 3=BN bias (folded)
    o_ref:       [bb, HO2*WO2, C_FEAT]
    pad_ref:     [bb, 2, 2, HO2+1, WO2+1, C_FEAT] VMEM scratch; after stage 1,
                 pad_ref[b,p,q,i,j,c] == zero-padded fused feature[b, 2i+p, 2j+q, c].
    """
    bb = patches_ref.shape[0]
    m1 = bb * HO1 * WO1
    m2 = bb * HO2 * WO2

    # ---- stage 1: backbone 3x3/s2 conv as one im2col matmul on the MXU -------
    p1 = patches_ref[...].reshape(m1, K1_PAD)
    acc1 = jnp.dot(p1, w1_ref[...], preferred_element_type=jnp.float32)
    acc1 = acc1.reshape(bb, 2, 2, HO1 // 2, WO1 // 2, C_FEAT)

    par = par_ref[...]                                            # [bb, 4, C_FEAT]
    bias1 = par[:, 0, :].reshape(bb, 1, 1, 1, 1, C_FEAT)
    clin = par[:, 1, :].reshape(bb, 1, 1, 1, 1, C_FEAT)

    img = jnp.maximum(acc1 + bias1, 0.0)        # backbone ReLU
    fused = img + clin                          # fuse_feature_maps: 'add' (repeat fusion)

    # ---- write stage-1 result into the zero-padded parity-plane scratch ------
    # plane (p, q), element (i, j)  <->  padded feature row 2i+p, col 2j+q.
    # Output row y lands at padded row y+1: plane p = (y+1)%2, offset = 1-p.
    pad_ref[...] = jnp.zeros_like(pad_ref)
    for p in range(2):
        for q in range(2):
            ro, co = 1 - p, 1 - q
            pad_ref[:, p, q, ro:ro + HO1 // 2, co:co + WO1 // 2, :] = fused[:, p, q]

    # ---- stage 2: fuse conv 3x3/s2 as 9 contiguous-tap matmul accumulates ----
    acc2 = jnp.zeros((m2, C_FEAT), jnp.float32)
    for dy in range(3):
        for dx in range(3):
            t = dy * 3 + dx
            tap = pad_ref[:, dy % 2, dx % 2,
                          pl.ds(dy // 2, HO2), pl.ds(dx // 2, WO2), :]
            acc2 = acc2 + jnp.dot(tap.reshape(m2, C_FEAT),
                                  w2_ref[pl.ds(t * C_FEAT, C_FEAT), :],
                                  preferred_element_type=jnp.float32)

    # ---- folded eval-mode BatchNorm + ReLU epilogue (f32, v5e-safe) ----------
    scale = par[:, 2, :].reshape(bb, 1, C_FEAT)
    shift = par[:, 3, :].reshape(bb, 1, C_FEAT)
    out = jnp.maximum(acc2.reshape(bb, HO2 * WO2, C_FEAT) * scale + shift, 0.0)
    o_ref[...] = out


def fused_forward_call(patches, w1, w2, par):
    """patches:[B,2,2,8,8,K1_PAD]  w1:[K1_PAD,C_FEAT]  w2:[K2,C_FEAT]  par:[B,4,C_FEAT]"""
    bb = BB
    return pl.pallas_call(
        _fused_rcnn_kernel,
        out_shape=jax.ShapeDtypeStruct((B, HO2 * WO2, C_FEAT), jnp.float32),
        grid=(B // bb,),
        in_specs=[
            pl.BlockSpec((bb, 2, 2, HO1 // 2, WO1 // 2, K1_PAD),
                         lambda bi: (bi, 0, 0, 0, 0, 0)),
            pl.BlockSpec((K1_PAD, C_FEAT), lambda bi: (0, 0)),
            pl.BlockSpec((K2, C_FEAT), lambda bi: (0, 0)),
            pl.BlockSpec((bb, 4, C_FEAT), lambda bi: (bi, 0, 0)),
        ],
        out_specs=pl.BlockSpec((bb, HO2 * WO2, C_FEAT), lambda bi: (bi, 0, 0)),
        scratch_shapes=[pltpu.VMEM((bb, 2, 2, HO2 + 1, WO2 + 1, C_FEAT), jnp.float32)],
        compiler_params=pltpu.CompilerParams(dimension_semantics=("parallel",)),
    )(patches, w1, w2, par)


# ================================ JAX glue ================================

def build_stage1_patches(images_nchw):
    """im2col of the backbone 3x3/stride-2/pad-1 conv, grouped by the parity of
    the padded output row/col so the kernel can scatter its stage-1 result into
    the parity-plane scratch with contiguous static slices only."""
    x = jnp.transpose(images_nchw, (0, 2, 3, 1))                        # NHWC
    xp = jnp.pad(x, ((0, 0), (1, 1), (1, 1), (0, 0)))                   # [B,H+2,W+2,C]
    taps = [xp[:, dy:dy + 2 * HO1:2, dx:dx + 2 * WO1:2, :]              # [B,16,16,3]
            for dy in range(3) for dx in range(3)]
    patches = jnp.concatenate(taps, axis=-1)                            # [B,16,16,27]
    patches = jnp.pad(patches, ((0, 0), (0, 0), (0, 0), (0, K1_PAD - K1)))
    pg = patches.reshape(B, HO1 // 2, 2, WO1 // 2, 2, K1_PAD)           # y = 2*ii + r
    pg = pg[:, :, ::-1, :, ::-1, :]                                     # plane p = 1 - r
    return jnp.transpose(pg, (0, 2, 4, 1, 3, 5))                        # [B,2,2,8,8,K1_PAD]


def init_params(key):
    ks = jax.random.split(key, 10)
    return {
        # backbone: Conv2d(3, C_FEAT, 3, stride=2, pad=1) + ReLU  (synthetic stand-in)
        "bb_w": 0.1 * jax.random.normal(ks[0], (3, 3, C_IN, C_FEAT), jnp.float32),   # HWIO
        "bb_b": 0.1 * jax.random.normal(ks[1], (C_FEAT,), jnp.float32),
        # gender_emb_layer: nn.Embedding(2, EMB_DIM)
        "emb": 0.1 * jax.random.normal(ks[2], (2, EMB_DIM), jnp.float32),
        # before_repeat['0']: nn.Linear(CLIN_DIM, C_FEAT)  (stored as [in, out])
        "br_w": 0.1 * jax.random.normal(ks[3], (CLIN_DIM, C_FEAT), jnp.float32),
        "br_b": 0.1 * jax.random.normal(ks[4], (C_FEAT,), jnp.float32),
        # fuse_convs: Conv2d(C_FEAT, C_FEAT, 3, stride=2, pad=1) + BatchNorm2d + ReLU
        "fc_w": 0.1 * jax.random.normal(ks[5], (3, 3, C_FEAT, C_FEAT), jnp.float32),  # HWIO
        "fc_b": 0.1 * jax.random.normal(ks[6], (C_FEAT,), jnp.float32),
        "bn_g": 1.0 + 0.1 * jax.random.normal(ks[7], (C_FEAT,), jnp.float32),
        "bn_b": 0.1 * jax.random.normal(ks[8], (C_FEAT,), jnp.float32),
        "bn_m": 0.05 * jax.random.normal(ks[9], (C_FEAT,), jnp.float32),
        "bn_v": jnp.ones((C_FEAT,), jnp.float32),
    }


def prepare_kernel_params(p):
    """One-time prep: flatten conv weights (K padded 27->32) and fold eval-mode BN."""
    bn_scale = p["bn_g"] / jnp.sqrt(p["bn_v"] + BN_EPS)
    bn_bias = p["fc_b"] * bn_scale + (p["bn_b"] - p["bn_m"] * bn_scale)
    bb_wmat = jnp.pad(p["bb_w"].reshape(K1, C_FEAT), ((0, K1_PAD - K1), (0, 0)))
    return {
        "bb_wmat": bb_wmat,                                  # [32, 32]
        "bb_b": p["bb_b"],                                   # [32]
        "emb": p["emb"],
        "br_w": p["br_w"],
        "br_b": p["br_b"],
        "fc_wmat": p["fc_w"].reshape(K2, C_FEAT),            # [288, 32]
        "bn_scale": bn_scale,                                # [32]
        "bn_bias": bn_bias,                                  # [32]
    }


@jax.jit
def forward(kp, images_nchw, clinical_num, clinical_cat):
    """Pallas-backed forward of the multimodal fusion pipeline (eval-mode BN)."""
    # ---- get_clinical_features: Embedding + before_repeat Linear (M=B=2 -> plain XLA) ----
    emb_out = jnp.take(kp["emb"], clinical_cat, axis=0)                  # [B, EMB_DIM]
    clinical_input = jnp.concatenate([clinical_num, emb_out], axis=1)    # [B, CLIN_DIM]
    clin_proj = clinical_input @ kp["br_w"] + kp["br_b"]                 # [B, C_FEAT]

    # ---- stacked per-channel epilogue params: one operand / one DMA stream ----
    par = jnp.stack([
        jnp.broadcast_to(kp["bb_b"], (B, C_FEAT)),
        clin_proj,
        jnp.broadcast_to(kp["bn_scale"], (B, C_FEAT)),
        jnp.broadcast_to(kp["bn_bias"], (B, C_FEAT)),
    ], axis=1)                                                           # [B, 4, C_FEAT]

    # ---- single fused kernel: backbone conv + clinical add + fuse conv/BN/ReLU ----
    patches = build_stage1_patches(images_nchw)                          # [B,2,2,8,8,32]
    feat = fused_forward_call(patches, kp["bb_wmat"], kp["fc_wmat"], par)
    features = {"0": feat.reshape(B, HO2, WO2, C_FEAT)}                  # fed to RPN/ROI heads

    # TODO(synk): self.rpn / self.roi_heads / postprocess() not implemented (NMS, RoIAlign,
    #             dynamic box lists have no clean static-shape Pallas equivalent).
    losses = {}
    detections = None
    return features, clinical_input, losses, detections


def forward_reference(p, images_nchw, clinical_num, clinical_cat):
    """Pure-JAX reference (mirrors the PyTorch eval-mode math) for validation."""
    def conv3x3(xx, w, b, stride):
        return lax.conv_general_dilated(
            xx, w, window_strides=(stride, stride), padding=((1, 1), (1, 1)),
            dimension_numbers=("NHWC", "HWIO", "NHWC")) + b

    x = jnp.transpose(images_nchw, (0, 2, 3, 1))
    img_feat = jnp.maximum(conv3x3(x, p["bb_w"], p["bb_b"], 2), 0.0)
    emb_out = jnp.take(p["emb"], clinical_cat, axis=0)
    clinical_input = jnp.concatenate([clinical_num, emb_out], axis=1)
    clin_proj = clinical_input @ p["br_w"] + p["br_b"]
    fused = img_feat + clin_proj[:, None, None, :]
    conv = conv3x3(fused, p["fc_w"], p["fc_b"], 2)
    bn = p["bn_g"] * (conv - p["bn_m"]) / jnp.sqrt(p["bn_v"] + BN_EPS) + p["bn_b"]
    return {"0": jnp.maximum(bn, 0.0)}, clinical_input


if __name__ == "__main__":
    key = jax.random.PRNGKey(0)
    k_img, k_num, k_cat, k_par = jax.random.split(key, 4)

    images = jax.random.normal(k_img, (B, C_IN, H, W), jnp.float32)      # NCHW, like PyTorch
    clinical_num = jax.random.normal(k_num, (B, NUM_DIM), jnp.float32)   # torch.stack(clinical_num)
    clinical_cat = jax.random.randint(k_cat, (B,), 0, 2)                 # gender ids
    params = init_params(k_par)
    kparams = prepare_kernel_params(params)

    features, clinical_input, losses, detections = forward(
        kparams, images, clinical_num, clinical_cat)
    jax.block_until_ready(features["0"])

    ref_features, ref_clin = forward_reference(params, images, clinical_num, clinical_cat)
    assert jnp.allclose(features["0"], ref_features["0"], atol=2e-4, rtol=2e-4), "feature mismatch"
    assert jnp.allclose(clinical_input, ref_clin, atol=1e-5), "clinical input mismatch"

    print("KERNEL_OK")
</pallas_src>

<mosaic_0001>
module attributes {stable_mosaic.version = 11 : i64} {
  func.func @_fused_rcnn_kernel(%arg0: i32, %arg1: memref<2x2x2x8x8x32xf32, #tpu.memory_space<vmem>>, %arg2: memref<32x32xf32, #tpu.memory_space<vmem>>, %arg3: memref<288x32xf32, #tpu.memory_space<vmem>>, %arg4: memref<2x4x32xf32, #tpu.memory_space<vmem>>, %arg5: memref<2x64x32xf32, #tpu.memory_space<vmem>>, %arg6: memref<2x2x2x9x9x32xf32, #tpu.memory_space<vmem>>) attributes {dimension_semantics = [#tpu.dimension_semantics<parallel>], iteration_bounds = array<i64: 1>, scalar_prefetch = 0 : i64, scratch_operands = 1 : i64, tpu.core_type = #tpu.core_type<tc>, window_params = [{transform_indices = @transform_0, window_bounds = array<i64: 2, 2, 2, 8, 8, 32>}, {pipeline_mode = #tpu.pipeline_mode<synchronous>, transform_indices = @transform_1, window_bounds = array<i64: 32, 32>}, {pipeline_mode = #tpu.pipeline_mode<synchronous>, transform_indices = @transform_2, window_bounds = array<i64: 288, 32>}, {transform_indices = @transform_3, window_bounds = array<i64: 2, 4, 32>}, {transform_indices = @transform_4, window_bounds = array<i64: 2, 64, 32>}]} {
    %c0 = arith.constant 0 : index
    %c0_0 = arith.constant 0 : index
    %c0_1 = arith.constant 0 : index
    %c0_2 = arith.constant 0 : index
    %c0_3 = arith.constant 0 : index
    %c0_4 = arith.constant 0 : index
    %0 = vector.load %arg1[%c0, %c0_0, %c0_1, %c0_2, %c0_3, %c0_4] : memref<2x2x2x8x8x32xf32, #tpu.memory_space<vmem>>, vector<2x2x2x8x8x32xf32>
    %1 = vector.shape_cast %0 : vector<2x2x2x8x8x32xf32> to vector<512x32xf32>
    %c0_5 = arith.constant 0 : index
    %c0_6 = arith.constant 0 : index
    %2 = vector.load %arg2[%c0_5, %c0_6] : memref<32x32xf32, #tpu.memory_space<vmem>>, vector<32x32xf32>
    %cst = arith.constant dense<0.000000e+00> : vector<512x32xf32>
    %3 = tpu.matmul %1, %2, %cst {dimension_numbers = #tpu.dot_dimension_numbers<[1], [0], [0], [1], [0, 0, 1, 1], [], []>} : vector<512x32xf32>, vector<32x32xf32>, vector<512x32xf32> -> vector<512x32xf32>
    %4 = vector.shape_cast %3 : vector<512x32xf32> to vector<2x2x2x8x8x32xf32>
    %c0_7 = arith.constant 0 : index
    %c0_8 = arith.constant 0 : index
    %c0_9 = arith.constant 0 : index
    %5 = vector.load %arg4[%c0_7, %c0_8, %c0_9] : memref<2x4x32xf32, #tpu.memory_space<vmem>>, vector<2x4x32xf32>
    %6 = vector.extract_strided_slice %5 {offsets = [0, 0, 0], sizes = [2, 1, 32], strides = [1, 1, 1]} : vector<2x4x32xf32> to vector<2x1x32xf32>
    %7 = vector.shape_cast %6 : vector<2x1x32xf32> to vector<2x32xf32>
    %8 = vector.shape_cast %7 : vector<2x32xf32> to vector<2x1x1x1x1x32xf32>
    %9 = vector.extract_strided_slice %5 {offsets = [0, 1, 0], sizes = [2, 1, 32], strides = [1, 1, 1]} : vector<2x4x32xf32> to vector<2x1x32xf32>
    %10 = vector.shape_cast %9 : vector<2x1x32xf32> to vector<2x32xf32>
    %11 = vector.shape_cast %10 : vector<2x32xf32> to vector<2x1x1x1x1x32xf32>
    %12 = vector.broadcast %8 : vector<2x1x1x1x1x32xf32> to vector<2x2x2x8x8x32xf32>
    %13 = arith.addf %4, %12 : vector<2x2x2x8x8x32xf32>
    %cst_10 = arith.constant 0.000000e+00 : f32
    %14 = vector.broadcast %cst_10 : f32 to vector<2x2x2x8x8x32xf32>
    %15 = arith.maximumf %13, %14 : vector<2x2x2x8x8x32xf32>
    %16 = vector.broadcast %11 : vector<2x1x1x1x1x32xf32> to vector<2x2x2x8x8x32xf32>
    %17 = arith.addf %15, %16 : vector<2x2x2x8x8x32xf32>
    %cst_11 = arith.constant 0.000000e+00 : f32
    %18 = vector.broadcast %cst_11 : f32 to vector<2x2x2x9x9x32xf32>
    %c0_12 = arith.constant 0 : index
    %c0_13 = arith.constant 0 : index
    %c0_14 = arith.constant 0 : index
    %c0_15 = arith.constant 0 : index
    %c0_16 = arith.constant 0 : index
    %c0_17 = arith.constant 0 : index
    %19 = vector.load %arg6[%c0_12, %c0_13, %c0_14, %c0_15, %c0_16, %c0_17] : memref<2x2x2x9x9x32xf32, #tpu.memory_space<vmem>>, vector<2x2x2x9x9x32xf32>
    tpu.vector_store %arg6[%c0_12, %c0_13, %c0_14, %c0_15, %c0_16, %c0_17], %18 {strides = array<i32>} : memref<2x2x2x9x9x32xf32, #tpu.memory_space<vmem>>, vector<2x2x2x9x9x32xf32>,
    %20 = vector.extract_strided_slice %17 {offsets = [0, 0, 0, 0, 0, 0], sizes = [2, 1, 1, 8, 8, 32], strides = [1, 1, 1, 1, 1, 1]} : vector<2x2x2x8x8x32xf32> to vector<2x1x1x8x8x32xf32>
    %21 = vector.shape_cast %20 : vector<2x1x1x8x8x32xf32> to vector<2x8x8x32xf32>
    %c0_18 = arith.constant 0 : index
    %c0_19 = arith.constant 0 : index
    %c0_20 = arith.constant 0 : index
    %c1 = arith.constant 1 : index
    %c1_21 = arith.constant 1 : index
    %c0_22 = arith.constant 0 : index
    %22 = vector.load %arg6[%c0_18, %c0_19, %c0_20, %c1, %c1_21, %c0_22] : memref<2x2x2x9x9x32xf32, #tpu.memory_space<vmem>>, vector<2x1x1x8x8x32xf32>
    %23 = vector.shape_cast %22 : vector<2x1x1x8x8x32xf32> to vector<2x8x8x32xf32>
    %24 = vector.shape_cast %21 : vector<2x8x8x32xf32> to vector<2x1x1x8x8x32xf32>
    tpu.vector_store %arg6[%c0_18, %c0_19, %c0_20, %c1, %c1_21, %c0_22], %24 {strides = array<i32>} : memref<2x2x2x9x9x32xf32, #tpu.memory_space<vmem>>, vector<2x1x1x8x8x32xf32>,
    %25 = vector.extract_strided_slice %17 {offsets = [0, 0, 1, 0, 0, 0], sizes = [2, 1, 1, 8, 8, 32], strides = [1, 1, 1, 1, 1, 1]} : vector<2x2x2x8x8x32xf32> to vector<2x1x1x8x8x32xf32>
    %26 = vector.shape_cast %25 : vector<2x1x1x8x8x32xf32> to vector<2x8x8x32xf32>
    %c0_23 = arith.constant 0 : index
    %c0_24 = arith.constant 0 : index
    %c1_25 = arith.constant 1 : index
    %c1_26 = arith.constant 1 : index
    %c0_27 = arith.constant 0 : index
    %c0_28 = arith.constant 0 : index
    %27 = vector.load %arg6[%c0_23, %c0_24, %c1_25, %c1_26, %c0_27, %c0_28] : memref<2x2x2x9x9x32xf32, #tpu.memory_space<vmem>>, vector<2x1x1x8x8x32xf32>
    %28 = vector.shape_cast %27 : vector<2x1x1x8x8x32xf32> to vector<2x8x8x32xf32>
    %29 = vector.shape_cast %26 : vector<2x8x8x32xf32> to vector<2x1x1x8x8x32xf32>
    tpu.vector_store %arg6[%c0_23, %c0_24, %c1_25, %c1_26, %c0_27, %c0_28], %29 {strides = array<i32>} : memref<2x2x2x9x9x32xf32, #tpu.memory_space<vmem>>, vector<2x1x1x8x8x32xf32>,
    %30 = vector.extract_strided_slice %17 {offsets = [0, 1, 0, 0, 0, 0], sizes = [2, 1, 1, 8, 8, 32], strides = [1, 1, 1, 1, 1, 1]} : vector<2x2x2x8x8x32xf32> to vector<2x1x1x8x8x32xf32>
    %31 = vector.shape_cast %30 : vector<2x1x1x8x8x32xf32> to vector<2x8x8x32xf32>
    %c0_29 = arith.constant 0 : index
    %c1_30 = arith.constant 1 : index
    %c0_31 = arith.constant 0 : index
    %c0_32 = arith.constant 0 : index
    %c1_33 = arith.constant 1 : index
    %c0_34 = arith.constant 0 : index
    %32 = vector.load %arg6[%c0_29, %c1_30, %c0_31, %c0_32, %c1_33, %c0_34] : memref<2x2x2x9x9x32xf32, #tpu.memory_space<vmem>>, vector<2x1x1x8x8x32xf32>
    %33 = vector.shape_cast %32 : vector<2x1x1x8x8x32xf32> to vector<2x8x8x32xf32>
    %34 = vector.shape_cast %31 : vector<2x8x8x32xf32> to vector<2x1x1x8x8x32xf32>
    tpu.vector_store %arg6[%c0_29, %c1_30, %c0_31, %c0_32, %c1_33, %c0_34], %34 {strides = array<i32>} : memref<2x2x2x9x9x32xf32, #tpu.memory_space<vmem>>, vector<2x1x1x8x8x32xf32>,
    %35 = vector.extract_strided_slice %17 {offsets = [0, 1, 1, 0, 0, 0], sizes = [2, 1, 1, 8, 8, 32], strides = [1, 1, 1, 1, 1, 1]} : vector<2x2x2x8x8x32xf32> to vector<2x1x1x8x8x32xf32>
    %36 = vector.shape_cast %35 : vector<2x1x1x8x8x32xf32> to vector<2x8x8x32xf32>
    %c0_35 = arith.constant 0 : index
    %c1_36 = arith.constant 1 : index
    %c1_37 = arith.constant 1 : index
    %c0_38 = arith.constant 0 : index
    %c0_39 = arith.constant 0 : index
    %c0_40 = arith.constant 0 : index
    %37 = vector.load %arg6[%c0_35, %c1_36, %c1_37, %c0_38, %c0_39, %c0_40] : memref<2x2x2x9x9x32xf32, #tpu.memory_space<vmem>>, vector<2x1x1x8x8x32xf32>
    %38 = vector.shape_cast %37 : vector<2x1x1x8x8x32xf32> to vector<2x8x8x32xf32>
    %39 = vector.shape_cast %36 : vector<2x8x8x32xf32> to vector<2x1x1x8x8x32xf32>
    tpu.vector_store %arg6[%c0_35, %c1_36, %c1_37, %c0_38, %c0_39, %c0_40], %39 {strides = array<i32>} : memref<2x2x2x9x9x32xf32, #tpu.memory_space<vmem>>, vector<2x1x1x8x8x32xf32>,
    %cst_41 = arith.constant 0.000000e+00 : f32
    %40 = vector.broadcast %cst_41 : f32 to vector<128x32xf32>
    %c0_42 = arith.constant 0 : index
    %c0_43 = arith.constant 0 : index
    %c0_44 = arith.constant 0 : index
    %c0_45 = arith.constant 0 : index
    %c0_46 = arith.constant 0 : index
    %c0_47 = arith.constant 0 : index
    %41 = vector.load %arg6[%c0_42, %c0_43, %c0_44, %c0_45, %c0_46, %c0_47] : memref<2x2x2x9x9x32xf32, #tpu.memory_space<vmem>>, vector<2x1x1x8x8x32xf32>
    %42 = vector.shape_cast %41 : vector<2x1x1x8x8x32xf32> to vector<2x8x8x32xf32>
    %43 = vector.shape_cast %42 : vector<2x8x8x32xf32> to vector<128x32xf32>
    %c0_48 = arith.constant 0 : index
    %c0_49 = arith.constant 0 : index
    %44 = vector.load %arg3[%c0_48, %c0_49] : memref<288x32xf32, #tpu.memory_space<vmem>>, vector<32x32xf32>
    %cst_50 = arith.constant dense<0.000000e+00> : vector<128x32xf32>
    %45 = tpu.matmul %43, %44, %cst_50 {dimension_numbers = #tpu.dot_dimension_numbers<[1], [0], [0], [1], [0, 0, 1, 1], [], []>} : vector<128x32xf32>, vector<32x32xf32>, vector<128x32xf32> -> vector<128x32xf32>
    %46 = arith.addf %40, %45 : vector<128x32xf32>
    %c0_51 = arith.constant 0 : index
    %c0_52 = arith.constant 0 : index
    %c1_53 = arith.constant 1 : index
    %c0_54 = arith.constant 0 : index
    %c0_55 = arith.constant 0 : index
    %c0_56 = arith.constant 0 : index
    %47 = vector.load %arg6[%c0_51, %c0_52, %c1_53, %c0_54, %c0_55, %c0_56] : memref<2x2x2x9x9x32xf32, #tpu.memory_space<vmem>>, vector<2x1x1x8x8x32xf32>
    %48 = vector.shape_cast %47 : vector<2x1x1x8x8x32xf32> to vector<2x8x8x32xf32>
    %49 = vector.shape_cast %48 : vector<2x8x8x32xf32> to vector<128x32xf32>
    %c32 = arith.constant 32 : index
    %c0_57 = arith.constant 0 : index
    %50 = vector.load %arg3[%c32, %c0_57] : memref<288x32xf32, #tpu.memory_space<vmem>>, vector<32x32xf32>
    %cst_58 = arith.constant dense<0.000000e+00> : vector<128x32xf32>
    %51 = tpu.matmul %49, %50, %cst_58 {dimension_numbers = #tpu.dot_dimension_numbers<[1], [0], [0], [1], [0, 0, 1, 1], [], []>} : vector<128x32xf32>, vector<32x32xf32>, vector<128x32xf32> -> vector<128x32xf32>
    %52 = arith.addf %46, %51 : vector<128x32xf32>
    %c0_59 = arith.constant 0 : index
    %c0_60 = arith.constant 0 : index
    %c0_61 = arith.constant 0 : index
    %c0_62 = arith.constant 0 : index
    %c1_63 = arith.constant 1 : index
    %c0_64 = arith.constant 0 : index
    %53 = vector.load %arg6[%c0_59, %c0_60, %c0_61, %c0_62, %c1_63, %c0_64] : memref<2x2x2x9x9x32xf32, #tpu.memory_space<vmem>>, vector<2x1x1x8x8x32xf32>
    %54 = vector.shape_cast %53 : vector<2x1x1x8x8x32xf32> to vector<2x8x8x32xf32>
    %55 = vector.shape_cast %54 : vector<2x8x8x32xf32> to vector<128x32xf32>
    %c64 = arith.constant 64 : index
    %c0_65 = arith.constant 0 : index
    %56 = vector.load %arg3[%c64, %c0_65] : memref<288x32xf32, #tpu.memory_space<vmem>>, vector<32x32xf32>
    %cst_66 = arith.constant dense<0.000000e+00> : vector<128x32xf32>
    %57 = tpu.matmul %55, %56, %cst_66 {dimension_numbers = #tpu.dot_dimension_numbers<[1], [0], [0], [1], [0, 0, 1, 1], [], []>} : vector<128x32xf32>, vector<32x32xf32>, vector<128x32xf32> -> vector<128x32xf32>
    %58 = arith.addf %52, %57 : vector<128x32xf32>
    %c0_67 = arith.constant 0 : index
    %c1_68 = arith.constant 1 : index
    %c0_69 = arith.constant 0 : index
    %c0_70 = arith.constant 0 : index
    %c0_71 = arith.constant 0 : index
    %c0_72 = arith.constant 0 : index
    %59 = vector.load %arg6[%c0_67, %c1_68, %c0_69, %c0_70, %c0_71, %c0_72] : memref<2x2x2x9x9x32xf32, #tpu.memory_space<vmem>>, vector<2x1x1x8x8x32xf32>
    %60 = vector.shape_cast %59 : vector<2x1x1x8x8x32xf32> to vector<2x8x8x32xf32>
    %61 = vector.shape_cast %60 : vector<2x8x8x32xf32> to vector<128x32xf32>
    %c96 = arith.constant 96 : index
    %c0_73 = arith.constant 0 : index
    %62 = vector.load %arg3[%c96, %c0_73] : memref<288x32xf32, #tpu.memory_space<vmem>>, vector<32x32xf32>
    %cst_74 = arith.constant dense<0.000000e+00> : vector<128x32xf32>
    %63 = tpu.matmul %61, %62, %cst_74 {dimension_numbers = #tpu.dot_dimension_numbers<[1], [0], [0], [1], [0, 0, 1, 1], [], []>} : vector<128x32xf32>, vector<32x32xf32>, vector<128x32xf32> -> vector<128x32xf32>
    %64 = arith.addf %58, %63 : vector<128x32xf32>
    %c0_75 = arith.constant 0 : index
    %c1_76 = arith.constant 1 : index
    %c1_77 = arith.constant 1 : index
    %c0_78 = arith.constant 0 : index
    %c0_79 = arith.constant 0 : index
    %c0_80 = arith.constant 0 : index
    %65 = vector.load %arg6[%c0_75, %c1_76, %c1_77, %c0_78, %c0_79, %c0_80] : memref<2x2x2x9x9x32xf32, #tpu.memory_space<vmem>>, vector<2x1x1x8x8x32xf32>
    %66 = vector.shape_cast %65 : vector<2x1x1x8x8x32xf32> to vector<2x8x8x32xf32>
    %67 = vector.shape_cast %66 : vector<2x8x8x32xf32> to vector<128x32xf32>
    %c128 = arith.constant 128 : index
    %c0_81 = arith.constant 0 : index
    %68 = vector.load %arg3[%c128, %c0_81] : memref<288x32xf32, #tpu.memory_space<vmem>>, vector<32x32xf32>
    %cst_82 = arith.constant dense<0.000000e+00> : vector<128x32xf32>
    %69 = tpu.matmul %67, %68, %cst_82 {dimension_numbers = #tpu.dot_dimension_numbers<[1], [0], [0], [1], [0, 0, 1, 1], [], []>} : vector<128x32xf32>, vector<32x32xf32>, vector<128x32xf32> -> vector<128x32xf32>
    %70 = arith.addf %64, %69 : vector<128x32xf32>
    %c0_83 = arith.constant 0 : index
    %c1_84 = arith.constant 1 : index
    %c0_85 = arith.constant 0 : index
    %c0_86 = arith.constant 0 : index
    %c1_87 = arith.constant 1 : index
    %c0_88 = arith.constant 0 : index
    %71 = vector.load %arg6[%c0_83, %c1_84, %c0_85, %c0_86, %c1_87, %c0_88] : memref<2x2x2x9x9x32xf32, #tpu.memory_space<vmem>>, vector<2x1x1x8x8x32xf32>
    %72 = vector.shape_cast %71 : vector<2x1x1x8x8x32xf32> to vector<2x8x8x32xf32>
    %73 = vector.shape_cast %72 : vector<2x8x8x32xf32> to vector<128x32xf32>
    %c160 = arith.constant 160 : index
    %c0_89 = arith.constant 0 : index
    %74 = vector.load %arg3[%c160, %c0_89] : memref<288x32xf32, #tpu.memory_space<vmem>>, vector<32x32xf32>
    %cst_90 = arith.constant dense<0.000000e+00> : vector<128x32xf32>
    %75 = tpu.matmul %73, %74, %cst_90 {dimension_numbers = #tpu.dot_dimension_numbers<[1], [0], [0], [1], [0, 0, 1, 1], [], []>} : vector<128x32xf32>, vector<32x32xf32>, vector<128x32xf32> -> vector<128x32xf32>
    %76 = arith.addf %70, %75 : vector<128x32xf32>
    %c0_91 = arith.constant 0 : index
    %c0_92 = arith.constant 0 : index
    %c0_93 = arith.constant 0 : index
    %c1_94 = arith.constant 1 : index
    %c0_95 = arith.constant 0 : index
    %c0_96 = arith.constant 0 : index
    %77 = vector.load %arg6[%c0_91, %c0_92, %c0_93, %c1_94, %c0_95, %c0_96] : memref<2x2x2x9x9x32xf32, #tpu.memory_space<vmem>>, vector<2x1x1x8x8x32xf32>
    %78 = vector.shape_cast %77 : vector<2x1x1x8x8x32xf32> to vector<2x8x8x32xf32>
    %79 = vector.shape_cast %78 : vector<2x8x8x32xf32> to vector<128x32xf32>
    %c192 = arith.constant 192 : index
    %c0_97 = arith.constant 0 : index
    %80 = vector.load %arg3[%c192, %c0_97] : memref<288x32xf32, #tpu.memory_space<vmem>>, vector<32x32xf32>
    %cst_98 = arith.constant dense<0.000000e+00> : vector<128x32xf32>
    %81 = tpu.matmul %79, %80, %cst_98 {dimension_numbers = #tpu.dot_dimension_numbers<[1], [0], [0], [1], [0, 0, 1, 1], [], []>} : vector<128x32xf32>, vector<32x32xf32>, vector<128x32xf32> -> vector<128x32xf32>
    %82 = arith.addf %76, %81 : vector<128x32xf32>
    %c0_99 = arith.constant 0 : index
    %c0_100 = arith.constant 0 : index
    %c1_101 = arith.constant 1 : index
    %c1_102 = arith.constant 1 : index
    %c0_103 = arith.constant 0 : index
    %c0_104 = arith.constant 0 : index
    %83 = vector.load %arg6[%c0_99, %c0_100, %c1_101, %c1_102, %c0_103, %c0_104] : memref<2x2x2x9x9x32xf32, #tpu.memory_space<vmem>>, vector<2x1x1x8x8x32xf32>
    %84 = vector.shape_cast %83 : vector<2x1x1x8x8x32xf32> to vector<2x8x8x32xf32>
    %85 = vector.shape_cast %84 : vector<2x8x8x32xf32> to vector<128x32xf32>
    %c224 = arith.constant 224 : index
    %c0_105 = arith.constant 0 : index
    %86 = vector.load %arg3[%c224, %c0_105] : memref<288x32xf32, #tpu.memory_space<vmem>>, vector<32x32xf32>
    %cst_106 = arith.constant dense<0.000000e+00> : vector<128x32xf32>
    %87 = tpu.matmul %85, %86, %cst_106 {dimension_numbers = #tpu.dot_dimension_numbers<[1], [0], [0], [1], [0, 0, 1, 1], [], []>} : vector<128x32xf32>, vector<32x32xf32>, vector<128x32xf32> -> vector<128x32xf32>
    %88 = arith.addf %82, %87 : vector<128x32xf32>
    %c0_107 = arith.constant 0 : index
    %c0_108 = arith.constant 0 : index
    %c0_109 = arith.constant 0 : index
    %c1_110 = arith.constant 1 : index
    %c1_111 = arith.constant 1 : index
    %c0_112 = arith.constant 0 : index
    %89 = vector.load %arg6[%c0_107, %c0_108, %c0_109, %c1_110, %c1_111, %c0_112] : memref<2x2x2x9x9x32xf32, #tpu.memory_space<vmem>>, vector<2x1x1x8x8x32xf32>
    %90 = vector.shape_cast %89 : vector<2x1x1x8x8x32xf32> to vector<2x8x8x32xf32>
    %91 = vector.shape_cast %90 : vector<2x8x8x32xf32> to vector<128x32xf32>
    %c256 = arith.constant 256 : index
    %c0_113 = arith.constant 0 : index
    %92 = vector.load %arg3[%c256, %c0_113] : memref<288x32xf32, #tpu.memory_space<vmem>>, vector<32x32xf32>
    %cst_114 = arith.constant dense<0.000000e+00> : vector<128x32xf32>
    %93 = tpu.matmul %91, %92, %cst_114 {dimension_numbers = #tpu.dot_dimension_numbers<[1], [0], [0], [1], [0, 0, 1, 1], [], []>} : vector<128x32xf32>, vector<32x32xf32>, vector<128x32xf32> -> vector<128x32xf32>
    %94 = arith.addf %88, %93 : vector<128x32xf32>
    %95 = vector.extract_strided_slice %5 {offsets = [0, 2, 0], sizes = [2, 1, 32], strides = [1, 1, 1]} : vector<2x4x32xf32> to vector<2x1x32xf32>
    %96 = vector.shape_cast %95 : vector<2x1x32xf32> to vector<2x32xf32>
    %97 = vector.shape_cast %96 : vector<2x32xf32> to vector<2x1x32xf32>
    %98 = vector.extract_strided_slice %5 {offsets = [0, 3, 0], sizes = [2, 1, 32], strides = [1, 1, 1]} : vector<2x4x32xf32> to vector<2x1x32xf32>
    %99 = vector.shape_cast %98 : vector<2x1x32xf32> to vector<2x32xf32>
    %100 = vector.shape_cast %99 : vector<2x32xf32> to vector<2x1x32xf32>
    %101 = vector.shape_cast %94 : vector<128x32xf32> to vector<2x64x32xf32>
    %102 = vector.broadcast %97 : vector<2x1x32xf32> to vector<2x64x32xf32>
    %103 = arith.mulf %101, %102 : vector<2x64x32xf32>
    %104 = vector.broadcast %100 : vector<2x1x32xf32> to vector<2x64x32xf32>
    %105 = arith.addf %103, %104 : vector<2x64x32xf32>
    %cst_115 = arith.constant 0.000000e+00 : f32
    %106 = vector.broadcast %cst_115 : f32 to vector<2x64x32xf32>
    %107 = arith.maximumf %105, %106 : vector<2x64x32xf32>
    %c0_116 = arith.constant 0 : index
    %c0_117 = arith.constant 0 : index
    %c0_118 = arith.constant 0 : index
    %108 = vector.load %arg5[%c0_116, %c0_117, %c0_118] : memref<2x64x32xf32, #tpu.memory_space<vmem>>, vector<2x64x32xf32>
    tpu.vector_store %arg5[%c0_116, %c0_117, %c0_118], %107 {strides = array<i32>} : memref<2x64x32xf32, #tpu.memory_space<vmem>>, vector<2x64x32xf32>,
    return
  }
  func.func @transform_0(%arg0: i32) -> (i32, i32, i32, i32, i32, i32) {
    %c0_i32 = arith.constant 0 : i32
    %c0_i32_0 = arith.constant 0 : i32
    %c0_i32_1 = arith.constant 0 : i32
    %c0_i32_2 = arith.constant 0 : i32
    %c0_i32_3 = arith.constant 0 : i32
    %c0_i32_4 = arith.constant 0 : i32
    return %arg0, %c0_i32, %c0_i32_0, %c0_i32_1, %c0_i32_2, %c0_i32_3 : i32, i32, i32, i32, i32, i32
  }
  func.func @transform_1(%arg0: i32) -> (i32, i32) {
    %c0_i32 = arith.constant 0 : i32
    %c0_i32_0 = arith.constant 0 : i32
    %c0_i32_1 = arith.constant 0 : i32
    return %c0_i32, %c0_i32_0 : i32, i32
  }
  func.func @transform_2(%arg0: i32) -> (i32, i32) {
    %c0_i32 = arith.constant 0 : i32
    %c0_i32_0 = arith.constant 0 : i32
    %c0_i32_1 = arith.constant 0 : i32
    return %c0_i32, %c0_i32_0 : i32, i32
  }
  func.func @transform_3(%arg0: i32) -> (i32, i32, i32) {
    %c0_i32 = arith.constant 0 : i32
    %c0_i32_0 = arith.constant 0 : i32
    %c0_i32_1 = arith.constant 0 : i32
    return %arg0, %c0_i32, %c0_i32_0 : i32, i32, i32
  }
  func.func @transform_4(%arg0: i32) -> (i32, i32, i32) {
    %c0_i32 = arith.constant 0 : i32
    %c0_i32_0 = arith.constant 0 : i32
    %c0_i32_1 = arith.constant 0 : i32
    return %arg0, %c0_i32, %c0_i32_0 : i32, i32, i32
  }
}

</mosaic_0001>

<llo_original>
// kernel: forward.1
$region0: #{forward.1}
  #allocation0 [shape = 'u32[]', space=smem, size = 0x4, offset = 0x4, fixed_abs, tag = 'smem constant byte address 0x4 - core index']
  #allocation1 [shape = 'u32[72,128]{1,0:T(1,128)}', space=vmem, size = 0x9000, scoped, tag = 'internal scratch']
  #allocation2 [shape = 'f32[2,2,2,9,9,32]{5,4,3,2,1,0:T(8,128)}', space=vmem, size = 0x90000, scoped, tag = 'scratch operand']
  %s0 = inlined_call_operand.vmem [shape: f32[2,2,2,8,8,32], index: 0, kind: input, shape index: {}]
  %s1 = inlined_call_operand.vmem [shape: f32[32,32], index: 1, kind: input, shape index: {}]
  %s2 = inlined_call_operand.vmem [shape: f32[288,32], index: 2, kind: input, shape index: {}]
  %s3 = inlined_call_operand.vmem [shape: f32[2,4,32], index: 3, kind: input, shape index: {}]
  %s4 = inlined_call_operand.hbm [shape: f32[2,64,32], index: 4, kind: output, shape index: {}]
  %s5 = sld [smem:[#allocation0]]
  $region26: #{forward.1} parent=0
    _
  %s7 = ssub.s32 1, %s5
  %s8 = scalar_select 0, %s7, %s5
  $region1: #{forward.1} parent=0
    #allocation3 [shape = 'u8[65536]{0}', space=vmem, size = 0x10000, scoped, tag = 'output window, operand 0, single buffered']
    #allocation4 [shape = 's32[1]{0}', space=sflag, size = 0x4, scoped, tag = 'scoped memory for forward.1']
    %9 = vsyncpa [#allocation4], 0
    // Predicated region
    $region2: #{forward.1} parent=1 // pred_check
      _
    $region3: #{forward.1} parent=1 // pred_check_branch
      %11 = sbr.rel (0) target = $region5
    $region4: #{forward.1} parent=1 // pred_region
      _
    $region5: #{forward.1} parent=1 // pred_fallthru
      _
    // Predicated region
    $region6: #{forward.1} parent=1 // pred_check
      _
    $region7: #{forward.1} parent=1 // pred_check_branch
      %13 = sbr.rel (0) target = $region9
    $region8: #{forward.1} parent=1 // pred_region
      _
    $region9: #{forward.1} parent=1 // pred_fallthru
      _
    // Predicated region
    $region10: #{forward.1} parent=1 // pred_check
      _
    $region11: #{forward.1} parent=1 // pred_check_branch
      %15 = sbr.rel (0) target = $region13
    $region12: #{forward.1} parent=1 // pred_region
      _
    $region13: #{forward.1} parent=1 // pred_fallthru
      _
    // Predicated region
    $region14: #{forward.1} parent=1 // pred_check
      _
    $region15: #{forward.1} parent=1 // pred_check_branch
      %17 = sbr.rel (0) target = $region17
    $region16: #{forward.1} parent=1 // pred_region
      _
    $region17: #{forward.1} parent=1 // pred_fallthru
      _
    %v18 = vld [vmem:[%s0] sm:$0xff]
    %v19 = vld [vmem:[%s0 + $0x8] sm:$0xff]
    %v20 = vld [vmem:[%s0 + $0x10] sm:$0xff]
    %v21 = vld [vmem:[%s0 + $0x18] sm:$0xff]
    %v22 = vld [vmem:[%s0 + $0x20] sm:$0xff]
    %v23 = vld [vmem:[%s0 + $0x28] sm:$0xff]
    %v24 = vld [vmem:[%s0 + $0x30] sm:$0xff]
    %v25 = vld [vmem:[%s0 + $0x38] sm:$0xff]
    %v26 = vld [vmem:[%s0 + $0x40] sm:$0xff]
    %v27 = vld [vmem:[%s0 + $0x48] sm:$0xff]
    %v28 = vld [vmem:[%s0 + $0x50] sm:$0xff]
    %v29 = vld [vmem:[%s0 + $0x58] sm:$0xff]
    %v30 = vld [vmem:[%s0 + $0x60] sm:$0xff]
    %v31 = vld [vmem:[%s0 + $0x68] sm:$0xff]
    %v32 = vld [vmem:[%s0 + $0x70] sm:$0xff]
    %v33 = vld [vmem:[%s0 + $0x78] sm:$0xff]
    %v34 = vld [vmem:[%s0 + $0x80] sm:$0xff]
    %v35 = vld [vmem:[%s0 + $0x88] sm:$0xff]
    %v36 = vld [vmem:[%s0 + $0x90] sm:$0xff]
    %v37 = vld [vmem:[%s0 + $0x98] sm:$0xff]
    %v38 = vld [vmem:[%s0 + $0xa0] sm:$0xff]
    %v39 = vld [vmem:[%s0 + $0xa8] sm:$0xff]
    %v40 = vld [vmem:[%s0 + $0xb0] sm:$0xff]
    %v41 = vld [vmem:[%s0 + $0xb8] sm:$0xff]
    %v42 = vld [vmem:[%s0 + $0xc0] sm:$0xff]
    %v43 = vld [vmem:[%s0 + $0xc8] sm:$0xff]
    %v44 = vld [vmem:[%s0 + $0xd0] sm:$0xff]
    %v45 = vld [vmem:[%s0 + $0xd8] sm:$0xff]
    %v46 = vld [vmem:[%s0 + $0xe0] sm:$0xff]
    %v47 = vld [vmem:[%s0 + $0xe8] sm:$0xff]
    %v48 = vld [vmem:[%s0 + $0xf0] sm:$0xff]
    %v49 = vld [vmem:[%s0 + $0xf8] sm:$0xff]
    %v50 = vld [vmem:[%s0 + $0x100] sm:$0xff]
    %v51 = vld [vmem:[%s0 + $0x108] sm:$0xff]
    %v52 = vld [vmem:[%s0 + $0x110] sm:$0xff]
    %v53 = vld [vmem:[%s0 + $0x118] sm:$0xff]
    %v54 = vld [vmem:[%s0 + $0x120] sm:$0xff]
    %v55 = vld [vmem:[%s0 + $0x128] sm:$0xff]
    %v56 = vld [vmem:[%s0 + $0x130] sm:$0xff]
    %v57 = vld [vmem:[%s0 + $0x138] sm:$0xff]
    %v58 = vld [vmem:[%s0 + $0x140] sm:$0xff]
    %v59 = vld [vmem:[%s0 + $0x148] sm:$0xff]
    %v60 = vld [vmem:[%s0 + $0x150] sm:$0xff]
    %v61 = vld [vmem:[%s0 + $0x158] sm:$0xff]
    %v62 = vld [vmem:[%s0 + $0x160] sm:$0xff]
    %v63 = vld [vmem:[%s0 + $0x168] sm:$0xff]
    %v64 = vld [vmem:[%s0 + $0x170] sm:$0xff]
    %v65 = vld [vmem:[%s0 + $0x178] sm:$0xff]
    %v66 = vld [vmem:[%s0 + $0x180] sm:$0xff]
    %v67 = vld [vmem:[%s0 + $0x188] sm:$0xff]
    %v68 = vld [vmem:[%s0 + $0x190] sm:$0xff]
    %v69 = vld [vmem:[%s0 + $0x198] sm:$0xff]
    %v70 = vld [vmem:[%s0 + $0x1a0] sm:$0xff]
    %v71 = vld [vmem:[%s0 + $0x1a8] sm:$0xff]
    %v72 = vld [vmem:[%s0 + $0x1b0] sm:$0xff]
    %v73 = vld [vmem:[%s0 + $0x1b8] sm:$0xff]
    %v74 = vld [vmem:[%s0 + $0x1c0] sm:$0xff]
    %v75 = vld [vmem:[%s0 + $0x1c8] sm:$0xff]
    %v76 = vld [vmem:[%s0 + $0x1d0] sm:$0xff]
    %v77 = vld [vmem:[%s0 + $0x1d8] sm:$0xff]
    %v78 = vld [vmem:[%s0 + $0x1e0] sm:$0xff]
    %v79 = vld [vmem:[%s0 + $0x1e8] sm:$0xff]
    %v80 = vld [vmem:[%s0 + $0x1f0] sm:$0xff]
    %v81 = vld [vmem:[%s0 + $0x1f8] sm:$0xff]
    %v82 = vld [vmem:[%s1] sm:$0xff]
    %v83 = vld [vmem:[%s1 + $0x8] sm:$0xff]
    %v84 = vld [vmem:[%s1 + $0x10] sm:$0xff]
    %v85 = vld [vmem:[%s1 + $0x18] sm:$0xff]
    %vm86 = vcmask 261120
    %v88 = vsel %vm86, %v18, 0
    %v91 = vsel %vm86, %v19, 0
    %v94 = vsel %vm86, %v20, 0
    %v97 = vsel %vm86, %v21, 0
    %v100 = vsel %vm86, %v22, 0
    %v103 = vsel %vm86, %v23, 0
    %v106 = vsel %vm86, %v24, 0
    %v109 = vsel %vm86, %v25, 0
    %v112 = vsel %vm86, %v26, 0
    %v115 = vsel %vm86, %v27, 0
    %v118 = vsel %vm86, %v28, 0
    %v121 = vsel %vm86, %v29, 0
    %v124 = vsel %vm86, %v30, 0
    %v127 = vsel %vm86, %v31, 0
    %v130 = vsel %vm86, %v32, 0
    %v133 = vsel %vm86, %v33, 0
    %v136 = vsel %vm86, %v34, 0
    %v139 = vsel %vm86, %v35, 0
    %v142 = vsel %vm86, %v36, 0
    %v145 = vsel %vm86, %v37, 0
    %v148 = vsel %vm86, %v38, 0
    %v151 = vsel %vm86, %v39, 0
    %v154 = vsel %vm86, %v40, 0
    %v157 = vsel %vm86, %v41, 0
    %v160 = vsel %vm86, %v42, 0
    %v163 = vsel %vm86, %v43, 0
    %v166 = vsel %vm86, %v44, 0
    %v169 = vsel %vm86, %v45, 0
    %v172 = vsel %vm86, %v46, 0
    %v175 = vsel %vm86, %v47, 0
    %v178 = vsel %vm86, %v48, 0
    %v181 = vsel %vm86, %v49, 0
    %v184 = vsel %vm86, %v50, 0
    %v187 = vsel %vm86, %v51, 0
    %v190 = vsel %vm86, %v52, 0
    %v193 = vsel %vm86, %v53, 0
    %v196 = vsel %vm86, %v54, 0
    %v199 = vsel %vm86, %v55, 0
    %v202 = vsel %vm86, %v56, 0
    %v205 = vsel %vm86, %v57, 0
    %v208 = vsel %vm86, %v58, 0
    %v211 = vsel %vm86, %v59, 0
    %v214 = vsel %vm86, %v60, 0
    %v217 = vsel %vm86, %v61, 0
    %v220 = vsel %vm86, %v62, 0
    %v223 = vsel %vm86, %v63, 0
    %v226 = vsel %vm86, %v64, 0
    %v229 = vsel %vm86, %v65, 0
    %v232 = vsel %vm86, %v66, 0
    %v235 = vsel %vm86, %v67, 0
    %v238 = vsel %vm86, %v68, 0
    %v241 = vsel %vm86, %v69, 0
    %v244 = vsel %vm86, %v70, 0
    %v247 = vsel %vm86, %v71, 0
    %v250 = vsel %vm86, %v72, 0
    %v253 = vsel %vm86, %v73, 0
    %v256 = vsel %vm86, %v74, 0
    %v259 = vsel %vm86, %v75, 0
    %v262 = vsel %vm86, %v76, 0
    %v265 = vsel %vm86, %v77, 0
    %v268 = vsel %vm86, %v78, 0
    %v271 = vsel %vm86, %v79, 0
    %v274 = vsel %vm86, %v80, 0
    %v277 = vsel %vm86, %v81, 0
    %279 = vmatpush.msra.mxu0 0.0
    %280 = vmatpush.msra.mxu0 0.0
    %281 = vmatpush.msra.mxu0 0.0
    %282 = vmatpush.msra.mxu0 0.0
    %283 = vmatpush.msra.mxu0 0.0
    %284 = vmatpush.msra.mxu0 0.0
    %285 = vmatpush.msra.mxu0 0.0
    %286 = vmatpush.msra.mxu0 0.0
    %287 = vmatpush.msra.mxu0 0.0
    %288 = vmatpush.msra.mxu0 0.0
    %289 = vmatpush.msra.mxu0 0.0
    %290 = vmatpush.msra.mxu0 0.0
    %291 = vmatpush.msra.mxu0 %v85
    %292 = vmatpush.msra.mxu0 %v84
    %293 = vmatpush.msra.mxu0 %v83
    %294 = vmatpush.msra.mxu0 %v82
    %295 = vmatmul.f32.gmra.mxu0 %v88
    %v296 = vpop.f32.mrf.mxu0
    %v297 = vadd.f32 0.0, %v296
    %298 = vmatmul.f32.gmra.mxu0 %v91
    %v299 = vpop.f32.mrf.mxu0
    %v300 = vadd.f32 0.0, %v299
    %301 = vmatmul.f32.gmra.mxu0 %v94
    %v302 = vpop.f32.mrf.mxu0
    %v303 = vadd.f32 0.0, %v302
    %304 = vmatmul.f32.gmra.mxu0 %v97
    %v305 = vpop.f32.mrf.mxu0
    %v306 = vadd.f32 0.0, %v305
    %307 = vmatmul.f32.gmra.mxu0 %v100
    %v308 = vpop.f32.mrf.mxu0
    %v309 = vadd.f32 0.0, %v308
    %310 = vmatmul.f32.gmra.mxu0 %v103
    %v311 = vpop.f32.mrf.mxu0
    %v312 = vadd.f32 0.0, %v311
    %313 = vmatmul.f32.gmra.mxu0 %v106
    %v314 = vpop.f32.mrf.mxu0
    %v315 = vadd.f32 0.0, %v314
    %316 = vmatmul.f32.gmra.mxu0 %v109
    %v317 = vpop.f32.mrf.mxu0
    %v318 = vadd.f32 0.0, %v317
    %319 = vmatmul.f32.gmra.mxu0 %v112
    %v320 = vpop.f32.mrf.mxu0
    %v321 = vadd.f32 0.0, %v320
    %322 = vmatmul.f32.gmra.mxu0 %v115
    %v323 = vpop.f32.mrf.mxu0
    %v324 = vadd.f32 0.0, %v323
    %325 = vmatmul.f32.gmra.mxu0 %v118
    %v326 = vpop.f32.mrf.mxu0
    %v327 = vadd.f32 0.0, %v326
    %328 = vmatmul.f32.gmra.mxu0 %v121
    %v329 = vpop.f32.mrf.mxu0
    %v330 = vadd.f32 0.0, %v329
    %331 = vmatmul.f32.gmra.mxu0 %v124
    %v332 = vpop.f32.mrf.mxu0
    %v333 = vadd.f32 0.0, %v332
    %334 = vmatmul.f32.gmra.mxu0 %v127
    %v335 = vpop.f32.mrf.mxu0
    %v336 = vadd.f32 0.0, %v335
    %337 = vmatmul.f32.gmra.mxu0 %v130
    %v338 = vpop.f32.mrf.mxu0
    %v339 = vadd.f32 0.0, %v338
    %340 = vmatmul.f32.gmra.mxu0 %v133
    %v341 = vpop.f32.mrf.mxu0
    %v342 = vadd.f32 0.0, %v341
    %343 = vmatmul.f32.gmra.mxu0 %v136
    %v344 = vpop.f32.mrf.mxu0
    %v345 = vadd.f32 0.0, %v344
    %346 = vmatmul.f32.gmra.mxu0 %v139
    %v347 = vpop.f32.mrf.mxu0
    %v348 = vadd.f32 0.0, %v347
    %349 = vmatmul.f32.gmra.mxu0 %v142
    %v350 = vpop.f32.mrf.mxu0
    %v351 = vadd.f32 0.0, %v350
    %352 = vmatmul.f32.gmra.mxu0 %v145
    %v353 = vpop.f32.mrf.mxu0
    %v354 = vadd.f32 0.0, %v353
    %355 = vmatmul.f32.gmra.mxu0 %v148
    %v356 = vpop.f32.mrf.mxu0
    %v357 = vadd.f32 0.0, %v356
    %358 = vmatmul.f32.gmra.mxu0 %v151
    %v359 = vpop.f32.mrf.mxu0
    %v360 = vadd.f32 0.0, %v359
    %361 = vmatmul.f32.gmra.mxu0 %v154
    %v362 = vpop.f32.mrf.mxu0
    %v363 = vadd.f32 0.0, %v362
    %364 = vmatmul.f32.gmra.mxu0 %v157
    %v365 = vpop.f32.mrf.mxu0
    %v366 = vadd.f32 0.0, %v365
    %367 = vmatmul.f32.gmra.mxu0 %v160
    %v368 = vpop.f32.mrf.mxu0
    %v369 = vadd.f32 0.0, %v368
    %370 = vmatmul.f32.gmra.mxu0 %v163
    %v371 = vpop.f32.mrf.mxu0
    %v372 = vadd.f32 0.0, %v371
    %373 = vmatmul.f32.gmra.mxu0 %v166
    %v374 = vpop.f32.mrf.mxu0
    %v375 = vadd.f32 0.0, %v374
    %376 = vmatmul.f32.gmra.mxu0 %v169
    %v377 = vpop.f32.mrf.mxu0
    %v378 = vadd.f32 0.0, %v377
    %379 = vmatmul.f32.gmra.mxu0 %v172
    %v380 = vpop.f32.mrf.mxu0
    %v381 = vadd.f32 0.0, %v380
    %382 = vmatmul.f32.gmra.mxu0 %v175
    %v383 = vpop.f32.mrf.mxu0
    %v384 = vadd.f32 0.0, %v383
    %385 = vmatmul.f32.gmra.mxu0 %v178
    %v386 = vpop.f32.mrf.mxu0
    %v387 = vadd.f32 0.0, %v386
    %388 = vmatmul.f32.gmra.mxu0 %v181
    %v389 = vpop.f32.mrf.mxu0
    %v390 = vadd.f32 0.0, %v389
    %391 = vmatmul.f32.gmra.mxu0 %v184
    %v392 = vpop.f32.mrf.mxu0
    %v393 = vadd.f32 0.0, %v392
    %394 = vmatmul.f32.gmra.mxu0 %v187
    %v395 = vpop.f32.mrf.mxu0
    %v396 = vadd.f32 0.0, %v395
    %397 = vmatmul.f32.gmra.mxu0 %v190
    %v398 = vpop.f32.mrf.mxu0
    %v399 = vadd.f32 0.0, %v398
    %400 = vmatmul.f32.gmra.mxu0 %v193
    %v401 = vpop.f32.mrf.mxu0
    %v402 = vadd.f32 0.0, %v401
    %403 = vmatmul.f32.gmra.mxu0 %v196
    %v404 = vpop.f32.mrf.mxu0
    %v405 = vadd.f32 0.0, %v404
    %406 = vmatmul.f32.gmra.mxu0 %v199
    %v407 = vpop.f32.mrf.mxu0
    %v408 = vadd.f32 0.0, %v407
    %409 = vmatmul.f32.gmra.mxu0 %v202
    %v410 = vpop.f32.mrf.mxu0
    %v411 = vadd.f32 0.0, %v410
    %412 = vmatmul.f32.gmra.mxu0 %v205
    %v413 = vpop.f32.mrf.mxu0
    %v414 = vadd.f32 0.0, %v413
    %415 = vmatmul.f32.gmra.mxu0 %v208
    %v416 = vpop.f32.mrf.mxu0
    %v417 = vadd.f32 0.0, %v416
    %418 = vmatmul.f32.gmra.mxu0 %v211
    %v419 = vpop.f32.mrf.mxu0
    %v420 = vadd.f32 0.0, %v419
    %421 = vmatmul.f32.gmra.mxu0 %v214
    %v422 = vpop.f32.mrf.mxu0
    %v423 = vadd.f32 0.0, %v422
    %424 = vmatmul.f32.gmra.mxu0 %v217
    %v425 = vpop.f32.mrf.mxu0
    %v426 = vadd.f32 0.0, %v425
    %427 = vmatmul.f32.gmra.mxu0 %v220
    %v428 = vpop.f32.mrf.mxu0
    %v429 = vadd.f32 0.0, %v428
    %430 = vmatmul.f32.gmra.mxu0 %v223
    %v431 = vpop.f32.mrf.mxu0
    %v432 = vadd.f32 0.0, %v431
    %433 = vmatmul.f32.gmra.mxu0 %v226
    %v434 = vpop.f32.mrf.mxu0
    %v435 = vadd.f32 0.0, %v434
    %436 = vmatmul.f32.gmra.mxu0 %v229
    %v437 = vpop.f32.mrf.mxu0
    %v438 = vadd.f32 0.0, %v437
    %439 = vmatmul.f32.gmra.mxu0 %v232
    %v440 = vpop.f32.mrf.mxu0
    %v441 = vadd.f32 0.0, %v440
    %442 = vmatmul.f32.gmra.mxu0 %v235
    %v443 = vpop.f32.mrf.mxu0
    %v444 = vadd.f32 0.0, %v443
    %445 = vmatmul.f32.gmra.mxu0 %v238
    %v446 = vpop.f32.mrf.mxu0
    %v447 = vadd.f32 0.0, %v446
    %448 = vmatmul.f32.gmra.mxu0 %v241
    %v449 = vpop.f32.mrf.mxu0
    %v450 = vadd.f32 0.0, %v449
    %451 = vmatmul.f32.gmra.mxu0 %v244
    %v452 = vpop.f32.mrf.mxu0
    %v453 = vadd.f32 0.0, %v452
    %454 = vmatmul.f32.gmra.mxu0 %v247
    %v455 = vpop.f32.mrf.mxu0
    %v456 = vadd.f32 0.0, %v455
    %457 = vmatmul.f32.gmra.mxu0 %v250
    %v458 = vpop.f32.mrf.mxu0
    %v459 = vadd.f32 0.0, %v458
    %460 = vmatmul.f32.gmra.mxu0 %v253
    %v461 = vpop.f32.mrf.mxu0
    %v462 = vadd.f32 0.0, %v461
    %463 = vmatmul.f32.gmra.mxu0 %v256
    %v464 = vpop.f32.mrf.mxu0
    %v465 = vadd.f32 0.0, %v464
    %466 = vmatmul.f32.gmra.mxu0 %v259
    %v467 = vpop.f32.mrf.mxu0
    %v468 = vadd.f32 0.0, %v467
    %469 = vmatmul.f32.gmra.mxu0 %v262
    %v470 = vpop.f32.mrf.mxu0
    %v471 = vadd.f32 0.0, %v470
    %472 = vmatmul.f32.gmra.mxu0 %v265
    %v473 = vpop.f32.mrf.mxu0
    %v474 = vadd.f32 0.0, %v473
    %475 = vmatmul.f32.gmra.mxu0 %v268
    %v476 = vpop.f32.mrf.mxu0
    %v477 = vadd.f32 0.0, %v476
    %478 = vmatmul.f32.gmra.mxu0 %v271
    %v479 = vpop.f32.mrf.mxu0
    %v480 = vadd.f32 0.0, %v479
    %481 = vmatmul.f32.gmra.mxu0 %v274
    %v482 = vpop.f32.mrf.mxu0
    %v483 = vadd.f32 0.0, %v482
    %484 = vmatmul.f32.gmra.mxu0 %v277
    %v485 = vpop.f32.mrf.mxu0
    %v486 = vadd.f32 0.0, %v485
    %487 = vdwg.mxu0
    %v488 = vld [vmem:[%s3] sm:$0xf]
    %v489 = vld [vmem:[%s3 + $0x4] sm:$0xf]
    %v490 = vperm.slane %v488, 0
    %v491 = vperm.slane %v489, 0
    %v492 = vadd.f32 %v297, %v490
    %v493 = vadd.f32 %v300, %v490
    %v494 = vadd.f32 %v303, %v490
    %v495 = vadd.f32 %v306, %v490
    %v496 = vadd.f32 %v309, %v490
    %v497 = vadd.f32 %v312, %v490
    %v498 = vadd.f32 %v315, %v490
    %v499 = vadd.f32 %v318, %v490
    %v500 = vadd.f32 %v321, %v490
    %v501 = vadd.f32 %v324, %v490
    %v502 = vadd.f32 %v327, %v490
    %v503 = vadd.f32 %v330, %v490
    %v504 = vadd.f32 %v333, %v490
    %v505 = vadd.f32 %v336, %v490
    %v506 = vadd.f32 %v339, %v490
    %v507 = vadd.f32 %v342, %v490
    %v508 = vadd.f32 %v345, %v490
    %v509 = vadd.f32 %v348, %v490
    %v510 = vadd.f32 %v351, %v490
    %v511 = vadd.f32 %v354, %v490
    %v512 = vadd.f32 %v357, %v490
    %v513 = vadd.f32 %v360, %v490
    %v514 = vadd.f32 %v363, %v490
    %v515 = vadd.f32 %v366, %v490
    %v516 = vadd.f32 %v369, %v490
    %v517 = vadd.f32 %v372, %v490
    %v518 = vadd.f32 %v375, %v490
    %v519 = vadd.f32 %v378, %v490
    %v520 = vadd.f32 %v381, %v490
    %v521 = vadd.f32 %v384, %v490
    %v522 = vadd.f32 %v387, %v490
    %v523 = vadd.f32 %v390, %v490
    %v524 = vadd.f32 %v393, %v491
    %v525 = vadd.f32 %v396, %v491
    %v526 = vadd.f32 %v399, %v491
    %v527 = vadd.f32 %v402, %v491
    %v528 = vadd.f32 %v405, %v491
    %v529 = vadd.f32 %v408, %v491
    %v530 = vadd.f32 %v411, %v491
    %v531 = vadd.f32 %v414, %v491
    %v532 = vadd.f32 %v417, %v491
    %v533 = vadd.f32 %v420, %v491
    %v534 = vadd.f32 %v423, %v491
    %v535 = vadd.f32 %v426, %v491
    %v536 = vadd.f32 %v429, %v491
    %v537 = vadd.f32 %v432, %v491
    %v538 = vadd.f32 %v435, %v491
    %v539 = vadd.f32 %v438, %v491
    %v540 = vadd.f32 %v441, %v491
    %v541 = vadd.f32 %v444, %v491
    %v542 = vadd.f32 %v447, %v491
    %v543 = vadd.f32 %v450, %v491
    %v544 = vadd.f32 %v453, %v491
    %v545 = vadd.f32 %v456, %v491
    %v546 = vadd.f32 %v459, %v491
    %v547 = vadd.f32 %v462, %v491
    %v548 = vadd.f32 %v465, %v491
    %v549 = vadd.f32 %v468, %v491
    %v550 = vadd.f32 %v471, %v491
    %v551 = vadd.f32 %v474, %v491
    %v552 = vadd.f32 %v477, %v491
    %v553 = vadd.f32 %v480, %v491
    %v554 = vadd.f32 %v483, %v491
    %v555 = vadd.f32 %v486, %v491
    %v556 = vmax.f32 %v492, 0.0
    %v557 = vmax.f32 %v493, 0.0
    %v558 = vmax.f32 %v494, 0.0
    %v559 = vmax.f32 %v495, 0.0
    %v560 = vmax.f32 %v496, 0.0
    %v561 = vmax.f32 %v497, 0.0
    %v562 = vmax.f32 %v498, 0.0
    %v563 = vmax.f32 %v499, 0.0
    %v564 = vmax.f32 %v500, 0.0
    %v565 = vmax.f32 %v501, 0.0
    %v566 = vmax.f32 %v502, 0.0
    %v567 = vmax.f32 %v503, 0.0
    %v568 = vmax.f32 %v504, 0.0
    %v569 = vmax.f32 %v505, 0.0
    %v570 = vmax.f32 %v506, 0.0
    %v571 = vmax.f32 %v507, 0.0
    %v572 = vmax.f32 %v508, 0.0
    %v573 = vmax.f32 %v509, 0.0
    %v574 = vmax.f32 %v510, 0.0
    %v575 = vmax.f32 %v511, 0.0
    %v576 = vmax.f32 %v512, 0.0
    %v577 = vmax.f32 %v513, 0.0
    %v578 = vmax.f32 %v514, 0.0
    %v579 = vmax.f32 %v515, 0.0
    %v580 = vmax.f32 %v516, 0.0
    %v581 = vmax.f32 %v517, 0.0
    %v582 = vmax.f32 %v518, 0.0
    %v583 = vmax.f32 %v519, 0.0
    %v584 = vmax.f32 %v520, 0.0
    %v585 = vmax.f32 %v521, 0.0
    %v586 = vmax.f32 %v522, 0.0
    %v587 = vmax.f32 %v523, 0.0
    %v588 = vmax.f32 %v524, 0.0
    %v589 = vmax.f32 %v525, 0.0
    %v590 = vmax.f32 %v526, 0.0
    %v591 = vmax.f32 %v527, 0.0
    %v592 = vmax.f32 %v528, 0.0
    %v593 = vmax.f32 %v529, 0.0
    %v594 = vmax.f32 %v530, 0.0
    %v595 = vmax.f32 %v531, 0.0
    %v596 = vmax.f32 %v532, 0.0
    %v597 = vmax.f32 %v533, 0.0
    %v598 = vmax.f32 %v534, 0.0
    %v599 = vmax.f32 %v535, 0.0
    %v600 = vmax.f32 %v536, 0.0
    %v601 = vmax.f32 %v537, 0.0
    %v602 = vmax.f32 %v538, 0.0
    %v603 = vmax.f32 %v539, 0.0
    %v604 = vmax.f32 %v540, 0.0
    %v605 = vmax.f32 %v541, 0.0
    %v606 = vmax.f32 %v542, 0.0
    %v607 = vmax.f32 %v543, 0.0
    %v608 = vmax.f32 %v544, 0.0
    %v609 = vmax.f32 %v545, 0.0
    %v610 = vmax.f32 %v546, 0.0
    %v611 = vmax.f32 %v547, 0.0
    %v612 = vmax.f32 %v548, 0.0
    %v613 = vmax.f32 %v549, 0.0
    %v614 = vmax.f32 %v550, 0.0
    %v615 = vmax.f32 %v551, 0.0
    %v616 = vmax.f32 %v552, 0.0
    %v617 = vmax.f32 %v553, 0.0
    %v618 = vmax.f32 %v554, 0.0
    %v619 = vmax.f32 %v555, 0.0
    %v620 = vperm.slane %v488, 1
    %v621 = vperm.slane %v489, 1
    %v622 = vadd.f32 %v556, %v620
    %v623 = vadd.f32 %v557, %v620
    %v624 = vadd.f32 %v558, %v620
    %v625 = vadd.f32 %v559, %v620
    %v626 = vadd.f32 %v560, %v620
    %v627 = vadd.f32 %v561, %v620
    %v628 = vadd.f32 %v562, %v620
    %v629 = vadd.f32 %v563, %v620
    %v630 = vadd.f32 %v564, %v620
    %v631 = vadd.f32 %v565, %v620
    %v632 = vadd.f32 %v566, %v620
    %v633 = vadd.f32 %v567, %v620
    %v634 = vadd.f32 %v568, %v620
    %v635 = vadd.f32 %v569, %v620
    %v636 = vadd.f32 %v570, %v620
    %v637 = vadd.f32 %v571, %v620
    %v638 = vadd.f32 %v572, %v620
    %v639 = vadd.f32 %v573, %v620
    %v640 = vadd.f32 %v574, %v620
    %v641 = vadd.f32 %v575, %v620
    %v642 = vadd.f32 %v576, %v620
    %v643 = vadd.f32 %v577, %v620
    %v644 = vadd.f32 %v578, %v620
    %v645 = vadd.f32 %v579, %v620
    %v646 = vadd.f32 %v580, %v620
    %v647 = vadd.f32 %v581, %v620
    %v648 = vadd.f32 %v582, %v620
    %v649 = vadd.f32 %v583, %v620
    %v650 = vadd.f32 %v584, %v620
    %v651 = vadd.f32 %v585, %v620
    %v652 = vadd.f32 %v586, %v620
    %v653 = vadd.f32 %v587, %v620
    %v654 = vadd.f32 %v588, %v621
    %v655 = vadd.f32 %v589, %v621
    %v656 = vadd.f32 %v590, %v621
    %v657 = vadd.f32 %v591, %v621
    %v658 = vadd.f32 %v592, %v621
    %v659 = vadd.f32 %v593, %v621
    %v660 = vadd.f32 %v594, %v621
    %v661 = vadd.f32 %v595, %v621
    %v662 = vadd.f32 %v596, %v621
    %v663 = vadd.f32 %v597, %v621
    %v664 = vadd.f32 %v598, %v621
    %v665 = vadd.f32 %v599, %v621
    %v666 = vadd.f32 %v600, %v621
    %v667 = vadd.f32 %v601, %v621
    %v668 = vadd.f32 %v602, %v621
    %v669 = vadd.f32 %v603, %v621
    %v670 = vadd.f32 %v604, %v621
    %v671 = vadd.f32 %v605, %v621
    %v672 = vadd.f32 %v606, %v621
    %v673 = vadd.f32 %v607, %v621
    %v674 = vadd.f32 %v608, %v621
    %v675 = vadd.f32 %v609, %v621
    %v676 = vadd.f32 %v610, %v621
    %v677 = vadd.f32 %v611, %v621
    %v678 = vadd.f32 %v612, %v621
    %v679 = vadd.f32 %v613, %v621
    %v680 = vadd.f32 %v614, %v621
    %v681 = vadd.f32 %v615, %v621
    %v682 = vadd.f32 %v616, %v621
    %v683 = vadd.f32 %v617, %v621
    %v684 = vadd.f32 %v618, %v621
    %v685 = vadd.f32 %v619, %v621
    %686 = vst.msk [vmem:[#allocation2] sm:$0xff] %vm86, 0.0
    %vm687 = vcmask 253952
    %688 = vst.msk [vmem:[#allocation2 + $0x8] sm:$0x1] %vm687, 0.0
    %689 = vst.msk [vmem:[#allocation2 + $0x10] sm:$0xff] %vm86, 0.0
    %690 = vst.msk [vmem:[#allocation2 + $0x18] sm:$0x1] %vm687, 0.0
    %691 = vst.msk [vmem:[#allocation2 + $0x20] sm:$0xff] %vm86, 0.0
    %692 = vst.msk [vmem:[#allocation2 + $0x28] sm:$0x1] %vm687, 0.0
    %693 = vst.msk [vmem:[#allocation2 + $0x30] sm:$0xff] %vm86, 0.0
    %694 = vst.msk [vmem:[#allocation2 + $0x38] sm:$0x1] %vm687, 0.0
    %695 = vst.msk [vmem:[#allocation2 + $0x40] sm:$0xff] %vm86, 0.0
    %696 = vst.msk [vmem:[#allocation2 + $0x48] sm:$0x1] %vm687, 0.0
    %697 = vst.msk [vmem:[#allocation2 + $0x50] sm:$0xff] %vm86, 0.0
    %698 = vst.msk [vmem:[#allocation2 + $0x58] sm:$0x1] %vm687, 0.0
    %699 = vst.msk [vmem:[#allocation2 + $0x60] sm:$0xff] %vm86, 0.0
    %700 = vst.msk [vmem:[#allocation2 + $0x68] sm:$0x1] %vm687, 0.0
    %701 = vst.msk [vmem:[#allocation2 + $0x70] sm:$0xff] %vm86, 0.0
    %702 = vst.msk [vmem:[#allocation2 + $0x78] sm:$0x1] %vm687, 0.0
    %703 = vst.msk [vmem:[#allocation2 + $0x80] sm:$0xff] %vm86, 0.0
    %704 = vst.msk [vmem:[#allocation2 + $0x88] sm:$0x1] %vm687, 0.0
    %705 = vst.msk [vmem:[#allocation2 + $0x90] sm:$0xff] %vm86, 0.0
    %706 = vst.msk [vmem:[#allocation2 + $0x98] sm:$0x1] %vm687, 0.0
    %707 = vst.msk [vmem:[#allocation2 + $0xa0] sm:$0xff] %vm86, 0.0
    %708 = vst.msk [vmem:[#allocation2 + $0xa8] sm:$0x1] %vm687, 0.0
    %709 = vst.msk [vmem:[#allocation2 + $0xb0] sm:$0xff] %vm86, 0.0
    %710 = vst.msk [vmem:[#allocation2 + $0xb8] sm:$0x1] %vm687, 0.0
    %711 = vst.msk [vmem:[#allocation2 + $0xc0] sm:$0xff] %vm86, 0.0
    %712 = vst.msk [vmem:[#allocation2 + $0xc8] sm:$0x1] %vm687, 0.0
    %713 = vst.msk [vmem:[#allocation2 + $0xd0] sm:$0xff] %vm86, 0.0
    %714 = vst.msk [vmem:[#allocation2 + $0xd8] sm:$0x1] %vm687, 0.0
    %715 = vst.msk [vmem:[#allocation2 + $0xe0] sm:$0xff] %vm86, 0.0
    %716 = vst.msk [vmem:[#allocation2 + $0xe8] sm:$0x1] %vm687, 0.0
    %717 = vst.msk [vmem:[#allocation2 + $0xf0] sm:$0xff] %vm86, 0.0
    %718 = vst.msk [vmem:[#allocation2 + $0xf8] sm:$0x1] %vm687, 0.0
    %719 = vst.msk [vmem:[#allocation2 + $0x100] sm:$0xff] %vm86, 0.0
    %720 = vst.msk [vmem:[#allocation2 + $0x108] sm:$0x1] %vm687, 0.0
    %721 = vst.msk [vmem:[#allocation2 + $0x110] sm:$0xff] %vm86, 0.0
    %722 = vst.msk [vmem:[#allocation2 + $0x118] sm:$0x1] %vm687, 0.0
    %723 = vst.msk [vmem:[#allocation2 + $0x120] sm:$0xff] %vm86, 0.0
    %724 = vst.msk [vmem:[#allocation2 + $0x128] sm:$0x1] %vm687, 0.0
    %725 = vst.msk [vmem:[#allocation2 + $0x130] sm:$0xff] %vm86, 0.0
    %726 = vst.msk [vmem:[#allocation2 + $0x138] sm:$0x1] %vm687, 0.0
    %727 = vst.msk [vmem:[#allocation2 + $0x140] sm:$0xff] %vm86, 0.0
    %728 = vst.msk [vmem:[#allocation2 + $0x148] sm:$0x1] %vm687, 0.0
    %729 = vst.msk [vmem:[#allocation2 + $0x150] sm:$0xff] %vm86, 0.0
    %730 = vst.msk [vmem:[#allocation2 + $0x158] sm:$0x1] %vm687, 0.0
    %731 = vst.msk [vmem:[#allocation2 + $0x160] sm:$0xff] %vm86, 0.0
    %732 = vst.msk [vmem:[#allocation2 + $0x168] sm:$0x1] %vm687, 0.0
    %733 = vst.msk [vmem:[#allocation2 + $0x170] sm:$0xff] %vm86, 0.0
    %734 = vst.msk [vmem:[#allocation2 + $0x178] sm:$0x1] %vm687, 0.0
    %735 = vst.msk [vmem:[#allocation2 + $0x180] sm:$0xff] %vm86, 0.0
    %736 = vst.msk [vmem:[#allocation2 + $0x188] sm:$0x1] %vm687, 0.0
    %737 = vst.msk [vmem:[#allocation2 + $0x190] sm:$0xff] %vm86, 0.0
    %738 = vst.msk [vmem:[#allocation2 + $0x198] sm:$0x1] %vm687, 0.0
    %739 = vst.msk [vmem:[#allocation2 + $0x1a0] sm:$0xff] %vm86, 0.0
    %740 = vst.msk [vmem:[#allocation2 + $0x1a8] sm:$0x1] %vm687, 0.0
    %741 = vst.msk [vmem:[#allocation2 + $0x1b0] sm:$0xff] %vm86, 0.0
    %742 = vst.msk [vmem:[#allocation2 + $0x1b8] sm:$0x1] %vm687, 0.0
    %743 = vst.msk [vmem:[#allocation2 + $0x1c0] sm:$0xff] %vm86, 0.0
    %744 = vst.msk [vmem:[#allocation2 + $0x1c8] sm:$0x1] %vm687, 0.0
    %745 = vst.msk [vmem:[#allocation2 + $0x1d0] sm:$0xff] %vm86, 0.0
    %746 = vst.msk [vmem:[#allocation2 + $0x1d8] sm:$0x1] %vm687, 0.0
    %747 = vst.msk [vmem:[#allocation2 + $0x1e0] sm:$0xff] %vm86, 0.0
    %748 = vst.msk [vmem:[#allocation2 + $0x1e8] sm:$0x1] %vm687, 0.0
    %749 = vst.msk [vmem:[#allocation2 + $0x1f0] sm:$0xff] %vm86, 0.0
    %750 = vst.msk [vmem:[#allocation2 + $0x1f8] sm:$0x1] %vm687, 0.0
    %751 = vst.msk [vmem:[#allocation2 + $0x200] sm:$0xff] %vm86, 0.0
    %752 = vst.msk [vmem:[#allocation2 + $0x208] sm:$0x1] %vm687, 0.0
    %753 = vst.msk [vmem:[#allocation2 + $0x210] sm:$0xff] %vm86, 0.0
    %754 = vst.msk [vmem:[#allocation2 + $0x218] sm:$0x1] %vm687, 0.0
    %755 = vst.msk [vmem:[#allocation2 + $0x220] sm:$0xff] %vm86, 0.0
    %756 = vst.msk [vmem:[#allocation2 + $0x228] sm:$0x1] %vm687, 0.0
    %757 = vst.msk [vmem:[#allocation2 + $0x230] sm:$0xff] %vm86, 0.0
    %758 = vst.msk [vmem:[#allocation2 + $0x238] sm:$0x1] %vm687, 0.0
    %759 = vst.msk [vmem:[#allocation2 + $0x240] sm:$0xff] %vm86, 0.0
    %760 = vst.msk [vmem:[#allocation2 + $0x248] sm:$0x1] %vm687, 0.0
    %761 = vst.msk [vmem:[#allocation2 + $0x250] sm:$0xff] %vm86, 0.0
    %762 = vst.msk [vmem:[#allocation2 + $0x258] sm:$0x1] %vm687, 0.0
    %763 = vst.msk [vmem:[#allocation2 + $0x260] sm:$0xff] %vm86, 0.0
    %764 = vst.msk [vmem:[#allocation2 + $0x268] sm:$0x1] %vm687, 0.0
    %765 = vst.msk [vmem:[#allocation2 + $0x270] sm:$0xff] %vm86, 0.0
    %766 = vst.msk [vmem:[#allocation2 + $0x278] sm:$0x1] %vm687, 0.0
    %767 = vst.msk [vmem:[#allocation2 + $0x280] sm:$0xff] %vm86, 0.0
    %768 = vst.msk [vmem:[#allocation2 + $0x288] sm:$0x1] %vm687, 0.0
    %769 = vst.msk [vmem:[#allocation2 + $0x290] sm:$0xff] %vm86, 0.0
    %770 = vst.msk [vmem:[#allocation2 + $0x298] sm:$0x1] %vm687, 0.0
    %771 = vst.msk [vmem:[#allocation2 + $0x2a0] sm:$0xff] %vm86, 0.0
    %772 = vst.msk [vmem:[#allocation2 + $0x2a8] sm:$0x1] %vm687, 0.0
    %773 = vst.msk [vmem:[#allocation2 + $0x2b0] sm:$0xff] %vm86, 0.0
    %774 = vst.msk [vmem:[#allocation2 + $0x2b8] sm:$0x1] %vm687, 0.0
    %775 = vst.msk [vmem:[#allocation2 + $0x2c0] sm:$0xff] %vm86, 0.0
    %776 = vst.msk [vmem:[#allocation2 + $0x2c8] sm:$0x1] %vm687, 0.0
    %777 = vst.msk [vmem:[#allocation2 + $0x2d0] sm:$0xff] %vm86, 0.0
    %778 = vst.msk [vmem:[#allocation2 + $0x2d8] sm:$0x1] %vm687, 0.0
    %779 = vst.msk [vmem:[#allocation2 + $0x2e0] sm:$0xff] %vm86, 0.0
    %780 = vst.msk [vmem:[#allocation2 + $0x2e8] sm:$0x1] %vm687, 0.0
    %781 = vst.msk [vmem:[#allocation2 + $0x2f0] sm:$0xff] %vm86, 0.0
    %782 = vst.msk [vmem:[#allocation2 + $0x2f8] sm:$0x1] %vm687, 0.0
    %783 = vst.msk [vmem:[#allocation2 + $0x300] sm:$0xff] %vm86, 0.0
    %784 = vst.msk [vmem:[#allocation2 + $0x308] sm:$0x1] %vm687, 0.0
    %785 = vst.msk [vmem:[#allocation2 + $0x310] sm:$0xff] %vm86, 0.0
    %786 = vst.msk [vmem:[#allocation2 + $0x318] sm:$0x1] %vm687, 0.0
    %787 = vst.msk [vmem:[#allocation2 + $0x320] sm:$0xff] %vm86, 0.0
    %788 = vst.msk [vmem:[#allocation2 + $0x328] sm:$0x1] %vm687, 0.0
    %789 = vst.msk [vmem:[#allocation2 + $0x330] sm:$0xff] %vm86, 0.0
    %790 = vst.msk [vmem:[#allocation2 + $0x338] sm:$0x1] %vm687, 0.0
    %791 = vst.msk [vmem:[#allocation2 + $0x340] sm:$0xff] %vm86, 0.0
    %792 = vst.msk [vmem:[#allocation2 + $0x348] sm:$0x1] %vm687, 0.0
    %793 = vst.msk [vmem:[#allocation2 + $0x350] sm:$0xff] %vm86, 0.0
    %794 = vst.msk [vmem:[#allocation2 + $0x358] sm:$0x1] %vm687, 0.0
    %795 = vst.msk [vmem:[#allocation2 + $0x360] sm:$0xff] %vm86, 0.0
    %796 = vst.msk [vmem:[#allocation2 + $0x368] sm:$0x1] %vm687, 0.0
    %797 = vst.msk [vmem:[#allocation2 + $0x370] sm:$0xff] %vm86, 0.0
    %798 = vst.msk [vmem:[#allocation2 + $0x378] sm:$0x1] %vm687, 0.0
    %799 = vst.msk [vmem:[#allocation2 + $0x380] sm:$0xff] %vm86, 0.0
    %800 = vst.msk [vmem:[#allocation2 + $0x388] sm:$0x1] %vm687, 0.0
    %801 = vst.msk [vmem:[#allocation2 + $0x390] sm:$0xff] %vm86, 0.0
    %802 = vst.msk [vmem:[#allocation2 + $0x398] sm:$0x1] %vm687, 0.0
    %803 = vst.msk [vmem:[#allocation2 + $0x3a0] sm:$0xff] %vm86, 0.0
    %804 = vst.msk [vmem:[#allocation2 + $0x3a8] sm:$0x1] %vm687, 0.0
    %805 = vst.msk [vmem:[#allocation2 + $0x3b0] sm:$0xff] %vm86, 0.0
    %806 = vst.msk [vmem:[#allocation2 + $0x3b8] sm:$0x1] %vm687, 0.0
    %807 = vst.msk [vmem:[#allocation2 + $0x3c0] sm:$0xff] %vm86, 0.0
    %808 = vst.msk [vmem:[#allocation2 + $0x3c8] sm:$0x1] %vm687, 0.0
    %809 = vst.msk [vmem:[#allocation2 + $0x3d0] sm:$0xff] %vm86, 0.0
    %810 = vst.msk [vmem:[#allocation2 + $0x3d8] sm:$0x1] %vm687, 0.0
    %811 = vst.msk [vmem:[#allocation2 + $0x3e0] sm:$0xff] %vm86, 0.0
    %812 = vst.msk [vmem:[#allocation2 + $0x3e8] sm:$0x1] %vm687, 0.0
    %813 = vst.msk [vmem:[#allocation2 + $0x3f0] sm:$0xff] %vm86, 0.0
    %814 = vst.msk [vmem:[#allocation2 + $0x3f8] sm:$0x1] %vm687, 0.0
    %815 = vst.msk [vmem:[#allocation2 + $0x400] sm:$0xff] %vm86, 0.0
    %816 = vst.msk [vmem:[#allocation2 + $0x408] sm:$0x1] %vm687, 0.0
    %817 = vst.msk [vmem:[#allocation2 + $0x410] sm:$0xff] %vm86, 0.0
    %818 = vst.msk [vmem:[#allocation2 + $0x418] sm:$0x1] %vm687, 0.0
    %819 = vst.msk [vmem:[#allocation2 + $0x420] sm:$0xff] %vm86, 0.0
    %820 = vst.msk [vmem:[#allocation2 + $0x428] sm:$0x1] %vm687, 0.0
    %821 = vst.msk [vmem:[#allocation2 + $0x430] sm:$0xff] %vm86, 0.0
    %822 = vst.msk [vmem:[#allocation2 + $0x438] sm:$0x1] %vm687, 0.0
    %823 = vst.msk [vmem:[#allocation2 + $0x440] sm:$0xff] %vm86, 0.0
    %824 = vst.msk [vmem:[#allocation2 + $0x448] sm:$0x1] %vm687, 0.0
    %825 = vst.msk [vmem:[#allocation2 + $0x450] sm:$0xff] %vm86, 0.0
    %826 = vst.msk [vmem:[#allocation2 + $0x458] sm:$0x1] %vm687, 0.0
    %827 = vst.msk [vmem:[#allocation2 + $0x460] sm:$0xff] %vm86, 0.0
    %828 = vst.msk [vmem:[#allocation2 + $0x468] sm:$0x1] %vm687, 0.0
    %829 = vst.msk [vmem:[#allocation2 + $0x470] sm:$0xff] %vm86, 0.0
    %830 = vst.msk [vmem:[#allocation2 + $0x478] sm:$0x1] %vm687, 0.0
    %s831 = scalar_lea.vmem [#allocation2], 16
    %832 = vst.msk [vmem:[%s831 + $0x1] sm:$0xff] %vm86, %v622
    %833 = vst.msk [vmem:[%s831 + $0x11] sm:$0xff] %vm86, %v623
    %834 = vst.msk [vmem:[%s831 + $0x21] sm:$0xff] %vm86, %v624
    %835 = vst.msk [vmem:[%s831 + $0x31] sm:$0xff] %vm86, %v625
    %836 = vst.msk [vmem:[%s831 + $0x41] sm:$0xff] %vm86, %v626
    %837 = vst.msk [vmem:[%s831 + $0x51] sm:$0xff] %vm86, %v627
    %838 = vst.msk [vmem:[%s831 + $0x61] sm:$0xff] %vm86, %v628
    %839 = vst.msk [vmem:[%s831 + $0x71] sm:$0xff] %vm86, %v629
    %840 = vst.msk [vmem:[%s831 + $0x241] sm:$0xff] %vm86, %v654
    %841 = vst.msk [vmem:[%s831 + $0x251] sm:$0xff] %vm86, %v655
    %842 = vst.msk [vmem:[%s831 + $0x261] sm:$0xff] %vm86, %v656
    %843 = vst.msk [vmem:[%s831 + $0x271] sm:$0xff] %vm86, %v657
    %844 = vst.msk [vmem:[%s831 + $0x281] sm:$0xff] %vm86, %v658
    %845 = vst.msk [vmem:[%s831 + $0x291] sm:$0xff] %vm86, %v659
    %846 = vst.msk [vmem:[%s831 + $0x2a1] sm:$0xff] %vm86, %v660
    %847 = vst.msk [vmem:[%s831 + $0x2b1] sm:$0xff] %vm86, %v661
    %s848 = scalar_lea.vmem [#allocation2], 160
    %849 = vst.msk [vmem:[%s848] sm:$0xff] %vm86, %v630
    %850 = vst.msk [vmem:[%s848 + $0x10] sm:$0xff] %vm86, %v631
    %851 = vst.msk [vmem:[%s848 + $0x20] sm:$0xff] %vm86, %v632
    %852 = vst.msk [vmem:[%s848 + $0x30] sm:$0xff] %vm86, %v633
    %853 = vst.msk [vmem:[%s848 + $0x40] sm:$0xff] %vm86, %v634
    %854 = vst.msk [vmem:[%s848 + $0x50] sm:$0xff] %vm86, %v635
    %855 = vst.msk [vmem:[%s848 + $0x60] sm:$0xff] %vm86, %v636
    %856 = vst.msk [vmem:[%s848 + $0x70] sm:$0xff] %vm86, %v637
    %857 = vst.msk [vmem:[%s848 + $0x240] sm:$0xff] %vm86, %v662
    %858 = vst.msk [vmem:[%s848 + $0x250] sm:$0xff] %vm86, %v663
    %859 = vst.msk [vmem:[%s848 + $0x260] sm:$0xff] %vm86, %v664
    %860 = vst.msk [vmem:[%s848 + $0x270] sm:$0xff] %vm86, %v665
    %861 = vst.msk [vmem:[%s848 + $0x280] sm:$0xff] %vm86, %v666
    %862 = vst.msk [vmem:[%s848 + $0x290] sm:$0xff] %vm86, %v667
    %863 = vst.msk [vmem:[%s848 + $0x2a0] sm:$0xff] %vm86, %v668
    %864 = vst.msk [vmem:[%s848 + $0x2b0] sm:$0xff] %vm86, %v669
    %s865 = scalar_lea.vmem [#allocation2], 288
    %866 = vst.msk [vmem:[%s865 + $0x1] sm:$0xff] %vm86, %v638
    %867 = vst.msk [vmem:[%s865 + $0x11] sm:$0xff] %vm86, %v639
    %868 = vst.msk [vmem:[%s865 + $0x21] sm:$0xff] %vm86, %v640
    %869 = vst.msk [vmem:[%s865 + $0x31] sm:$0xff] %vm86, %v641
    %870 = vst.msk [vmem:[%s865 + $0x41] sm:$0xff] %vm86, %v642
    %871 = vst.msk [vmem:[%s865 + $0x51] sm:$0xff] %vm86, %v643
    %872 = vst.msk [vmem:[%s865 + $0x61] sm:$0xff] %vm86, %v644
    %873 = vst.msk [vmem:[%s865 + $0x71] sm:$0xff] %vm86, %v645
    %874 = vst.msk [vmem:[%s865 + $0x241] sm:$0xff] %vm86, %v670
    %875 = vst.msk [vmem:[%s865 + $0x251] sm:$0xff] %vm86, %v671
    %876 = vst.msk [vmem:[%s865 + $0x261] sm:$0xff] %vm86, %v672
    %877 = vst.msk [vmem:[%s865 + $0x271] sm:$0xff] %vm86, %v673
    %878 = vst.msk [vmem:[%s865 + $0x281] sm:$0xff] %vm86, %v674
    %879 = vst.msk [vmem:[%s865 + $0x291] sm:$0xff] %vm86, %v675
    %880 = vst.msk [vmem:[%s865 + $0x2a1] sm:$0xff] %vm86, %v676
    %881 = vst.msk [vmem:[%s865 + $0x2b1] sm:$0xff] %vm86, %v677
    %s882 = scalar_lea.vmem [#allocation2], 432
    %883 = vst.msk [vmem:[%s882] sm:$0xff] %vm86, %v646
    %884 = vst.msk [vmem:[%s882 + $0x10] sm:$0xff] %vm86, %v647
    %885 = vst.msk [vmem:[%s882 + $0x20] sm:$0xff] %vm86, %v648
    %886 = vst.msk [vmem:[%s882 + $0x30] sm:$0xff] %vm86, %v649
    %887 = vst.msk [vmem:[%s882 + $0x40] sm:$0xff] %vm86, %v650
    %888 = vst.msk [vmem:[%s882 + $0x50] sm:$0xff] %vm86, %v651
    %889 = vst.msk [vmem:[%s882 + $0x60] sm:$0xff] %vm86, %v652
    %890 = vst.msk [vmem:[%s882 + $0x70] sm:$0xff] %vm86, %v653
    %891 = vst.msk [vmem:[%s882 + $0x240] sm:$0xff] %vm86, %v678
    %892 = vst.msk [vmem:[%s882 + $0x250] sm:$0xff] %vm86, %v679
    %893 = vst.msk [vmem:[%s882 + $0x260] sm:$0xff] %vm86, %v680
    %894 = vst.msk [vmem:[%s882 + $0x270] sm:$0xff] %vm86, %v681
    %895 = vst.msk [vmem:[%s882 + $0x280] sm:$0xff] %vm86, %v682
    %896 = vst.msk [vmem:[%s882 + $0x290] sm:$0xff] %vm86, %v683
    %897 = vst.msk [vmem:[%s882 + $0x2a0] sm:$0xff] %vm86, %v684
    %898 = vst.msk [vmem:[%s882 + $0x2b0] sm:$0xff] %vm86, %v685
    %v899 = vld [vmem:[#allocation2] sm:$0xff]
    %v900 = vld [vmem:[#allocation2 + $0x10] sm:$0xff]
    %v901 = vld [vmem:[#allocation2 + $0x20] sm:$0xff]
    %v902 = vld [vmem:[#allocation2 + $0x30] sm:$0xff]
    %v903 = vld [vmem:[#allocation2 + $0x40] sm:$0xff]
    %v904 = vld [vmem:[#allocation2 + $0x50] sm:$0xff]
    %v905 = vld [vmem:[#allocation2 + $0x60] sm:$0xff]
    %v906 = vld [vmem:[#allocation2 + $0x70] sm:$0xff]
    %v907 = vld [vmem:[#allocation2 + $0x240] sm:$0xff]
    %v908 = vld [vmem:[#allocation2 + $0x250] sm:$0xff]
    %v909 = vld [vmem:[#allocation2 + $0x260] sm:$0xff]
    %v910 = vld [vmem:[#allocation2 + $0x270] sm:$0xff]
    %v911 = vld [vmem:[#allocation2 + $0x280] sm:$0xff]
    %v912 = vld [vmem:[#allocation2 + $0x290] sm:$0xff]
    %v913 = vld [vmem:[#allocation2 + $0x2a0] sm:$0xff]
    %v914 = vld [vmem:[#allocation2 + $0x2b0] sm:$0xff]
    %v915 = vld [vmem:[%s2] sm:$0xff]
    %v916 = vld [vmem:[%s2 + $0x8] sm:$0xff]
    %v917 = vld [vmem:[%s2 + $0x10] sm:$0xff]
    %v918 = vld [vmem:[%s2 + $0x18] sm:$0xff]
    %s919 = scalar_lea.vmem [#allocation2], 144
    %v920 = vld [vmem:[%s919] sm:$0xff]
    %v921 = vld [vmem:[%s919 + $0x10] sm:$0xff]
    %v922 = vld [vmem:[%s919 + $0x20] sm:$0xff]
    %v923 = vld [vmem:[%s919 + $0x30] sm:$0xff]
    %v924 = vld [vmem:[%s919 + $0x40] sm:$0xff]
    %v925 = vld [vmem:[%s919 + $0x50] sm:$0xff]
    %v926 = vld [vmem:[%s919 + $0x60] sm:$0xff]
    %v927 = vld [vmem:[%s919 + $0x70] sm:$0xff]
    %v928 = vld [vmem:[%s919 + $0x240] sm:$0xff]
    %v929 = vld [vmem:[%s919 + $0x250] sm:$0xff]
    %v930 = vld [vmem:[%s919 + $0x260] sm:$0xff]
    %v931 = vld [vmem:[%s919 + $0x270] sm:$0xff]
    %v932 = vld [vmem:[%s919 + $0x280] sm:$0xff]
    %v933 = vld [vmem:[%s919 + $0x290] sm:$0xff]
    %v934 = vld [vmem:[%s919 + $0x2a0] sm:$0xff]
    %v935 = vld [vmem:[%s919 + $0x2b0] sm:$0xff]
    %v936 = vld [vmem:[%s2 + $0x20] sm:$0xff]
    %v937 = vld [vmem:[%s2 + $0x28] sm:$0xff]
    %v938 = vld [vmem:[%s2 + $0x30] sm:$0xff]
    %v939 = vld [vmem:[%s2 + $0x38] sm:$0xff]
    %v941 = vsel %vm86, %v920, 0
    %v944 = vsel %vm86, %v921, 0
    %v947 = vsel %vm86, %v922, 0
    %v950 = vsel %vm86, %v923, 0
    %v953 = vsel %vm86, %v924, 0
    %v956 = vsel %vm86, %v925, 0
    %v959 = vsel %vm86, %v926, 0
    %v962 = vsel %vm86, %v927, 0
    %v965 = vsel %vm86, %v928, 0
    %v968 = vsel %vm86, %v929, 0
    %v971 = vsel %vm86, %v930, 0
    %v974 = vsel %vm86, %v931, 0
    %v977 = vsel %vm86, %v932, 0
    %v980 = vsel %vm86, %v933, 0
    %v983 = vsel %vm86, %v934, 0
    %v986 = vsel %vm86, %v935, 0
    %988 = vmatpush.msra.mxu0 0.0
    %989 = vmatpush.msra.mxu0 0.0
    %990 = vmatpush.msra.mxu0 0.0
    %991 = vmatpush.msra.mxu0 0.0
    %992 = vmatpush.msra.mxu0 0.0
    %993 = vmatpush.msra.mxu0 0.0
    %994 = vmatpush.msra.mxu0 0.0
    %995 = vmatpush.msra.mxu0 0.0
    %996 = vmatpush.msra.mxu0 0.0
    %997 = vmatpush.msra.mxu0 0.0
    %998 = vmatpush.msra.mxu0 0.0
    %999 = vmatpush.msra.mxu0 0.0
    %1000 = vmatpush.msra.mxu0 %v939
    %1001 = vmatpush.msra.mxu0 %v938
    %1002 = vmatpush.msra.mxu0 %v937
    %1003 = vmatpush.msra.mxu0 %v936
    %1004 = vmatmul.f32.gmra.mxu0 %v941
    %v1005 = vpop.f32.mrf.mxu0
    %v1006 = vadd.f32 0.0, %v1005
    %1007 = vmatmul.f32.gmra.mxu0 %v944
    %v1008 = vpop.f32.mrf.mxu0
    %v1009 = vadd.f32 0.0, %v1008
    %1010 = vmatmul.f32.gmra.mxu0 %v947
    %v1011 = vpop.f32.mrf.mxu0
    %v1012 = vadd.f32 0.0, %v1011
    %1013 = vmatmul.f32.gmra.mxu0 %v950
    %v1014 = vpop.f32.mrf.mxu0
    %v1015 = vadd.f32 0.0, %v1014
    %1016 = vmatmul.f32.gmra.mxu0 %v953
    %v1017 = vpop.f32.mrf.mxu0
    %v1018 = vadd.f32 0.0, %v1017
    %1019 = vmatmul.f32.gmra.mxu0 %v956
    %v1020 = vpop.f32.mrf.mxu0
    %v1021 = vadd.f32 0.0, %v1020
    %1022 = vmatmul.f32.gmra.mxu0 %v959
    %v1023 = vpop.f32.mrf.mxu0
    %v1024 = vadd.f32 0.0, %v1023
    %1025 = vmatmul.f32.gmra.mxu0 %v962
    %v1026 = vpop.f32.mrf.mxu0
    %v1027 = vadd.f32 0.0, %v1026
    %1028 = vmatmul.f32.gmra.mxu0 %v965
    %v1029 = vpop.f32.mrf.mxu0
    %v1030 = vadd.f32 0.0, %v1029
    %1031 = vmatmul.f32.gmra.mxu0 %v968
    %v1032 = vpop.f32.mrf.mxu0
    %v1033 = vadd.f32 0.0, %v1032
    %1034 = vmatmul.f32.gmra.mxu0 %v971
    %v1035 = vpop.f32.mrf.mxu0
    %v1036 = vadd.f32 0.0, %v1035
    %1037 = vmatmul.f32.gmra.mxu0 %v974
    %v1038 = vpop.f32.mrf.mxu0
    %v1039 = vadd.f32 0.0, %v1038
    %1040 = vmatmul.f32.gmra.mxu0 %v977
    %v1041 = vpop.f32.mrf.mxu0
    %v1042 = vadd.f32 0.0, %v1041
    %1043 = vmatmul.f32.gmra.mxu0 %v980
    %v1044 = vpop.f32.mrf.mxu0
    %v1045 = vadd.f32 0.0, %v1044
    %1046 = vmatmul.f32.gmra.mxu0 %v983
    %v1047 = vpop.f32.mrf.mxu0
    %v1048 = vadd.f32 0.0, %v1047
    %1049 = vmatmul.f32.gmra.mxu0 %v986
    %v1050 = vpop.f32.mrf.mxu0
    %v1051 = vadd.f32 0.0, %v1050
    %1052 = vdwg.mxu0
    %v1054 = vsel %vm86, %v899, 0
    %v1057 = vsel %vm86, %v900, 0
    %v1060 = vsel %vm86, %v901, 0
    %v1063 = vsel %vm86, %v902, 0
    %v1066 = vsel %vm86, %v903, 0
    %v1069 = vsel %vm86, %v904, 0
    %v1072 = vsel %vm86, %v905, 0
    %v1075 = vsel %vm86, %v906, 0
    %v1078 = vsel %vm86, %v907, 0
    %v1081 = vsel %vm86, %v908, 0
    %v1084 = vsel %vm86, %v909, 0
    %v1087 = vsel %vm86, %v910, 0
    %v1090 = vsel %vm86, %v911, 0
    %v1093 = vsel %vm86, %v912, 0
    %v1096 = vsel %vm86, %v913, 0
    %v1099 = vsel %vm86, %v914, 0
    %1101 = vmatpush.msra.mxu0 0.0
    %1102 = vmatpush.msra.mxu0 0.0
    %1103 = vmatpush.msra.mxu0 0.0
    %1104 = vmatpush.msra.mxu0 0.0
    %1105 = vmatpush.msra.mxu0 0.0
    %1106 = vmatpush.msra.mxu0 0.0
    %1107 = vmatpush.msra.mxu0 0.0
    %1108 = vmatpush.msra.mxu0 0.0
    %1109 = vmatpush.msra.mxu0 0.0
    %1110 = vmatpush.msra.mxu0 0.0
    %1111 = vmatpush.msra.mxu0 0.0
    %1112 = vmatpush.msra.mxu0 0.0
    %1113 = vmatpush.msra.mxu0 %v918
    %1114 = vmatpush.msra.mxu0 %v917
    %1115 = vmatpush.msra.mxu0 %v916
    %1116 = vmatpush.msra.mxu0 %v915
    %1117 = vmatmul.f32.gmra.mxu0 %v1054
    %v1118 = vpop.f32.mrf.mxu0
    %v1119 = vadd.f32 %v1006, %v1118
    %1120 = vmatmul.f32.gmra.mxu0 %v1057
    %v1121 = vpop.f32.mrf.mxu0
    %v1122 = vadd.f32 %v1009, %v1121
    %1123 = vmatmul.f32.gmra.mxu0 %v1060
    %v1124 = vpop.f32.mrf.mxu0
    %v1125 = vadd.f32 %v1012, %v1124
    %1126 = vmatmul.f32.gmra.mxu0 %v1063
    %v1127 = vpop.f32.mrf.mxu0
    %v1128 = vadd.f32 %v1015, %v1127
    %1129 = vmatmul.f32.gmra.mxu0 %v1066
    %v1130 = vpop.f32.mrf.mxu0
    %v1131 = vadd.f32 %v1018, %v1130
    %1132 = vmatmul.f32.gmra.mxu0 %v1069
    %v1133 = vpop.f32.mrf.mxu0
    %v1134 = vadd.f32 %v1021, %v1133
    %1135 = vmatmul.f32.gmra.mxu0 %v1072
    %v1136 = vpop.f32.mrf.mxu0
    %v1137 = vadd.f32 %v1024, %v1136
    %1138 = vmatmul.f32.gmra.mxu0 %v1075
    %v1139 = vpop.f32.mrf.mxu0
    %v1140 = vadd.f32 %v1027, %v1139
    %1141 = vmatmul.f32.gmra.mxu0 %v1078
    %v1142 = vpop.f32.mrf.mxu0
    %v1143 = vadd.f32 %v1030, %v1142
    %1144 = vmatmul.f32.gmra.mxu0 %v1081
    %v1145 = vpop.f32.mrf.mxu0
    %v1146 = vadd.f32 %v1033, %v1145
    %1147 = vmatmul.f32.gmra.mxu0 %v1084
    %v1148 = vpop.f32.mrf.mxu0
    %v1149 = vadd.f32 %v1036, %v1148
    %1150 = vmatmul.f32.gmra.mxu0 %v1087
    %v1151 = vpop.f32.mrf.mxu0
    %v1152 = vadd.f32 %v1039, %v1151
    %1153 = vmatmul.f32.gmra.mxu0 %v1090
    %v1154 = vpop.f32.mrf.mxu0
    %v1155 = vadd.f32 %v1042, %v1154
    %1156 = vmatmul.f32.gmra.mxu0 %v1093
    %v1157 = vpop.f32.mrf.mxu0
    %v1158 = vadd.f32 %v1045, %v1157
    %1159 = vmatmul.f32.gmra.mxu0 %v1096
    %v1160 = vpop.f32.mrf.mxu0
    %v1161 = vadd.f32 %v1048, %v1160
    %1162 = vmatmul.f32.gmra.mxu0 %v1099
    %v1163 = vpop.f32.mrf.mxu0
    %v1164 = vadd.f32 %v1051, %v1163
    %1165 = vdwg.mxu0
    %v1166 = vld [vmem:[#allocation2 + $0x1] sm:$0xff]
    %v1167 = vld [vmem:[#allocation2 + $0x11] sm:$0xff]
    %v1168 = vld [vmem:[#allocation2 + $0x21] sm:$0xff]
    %v1169 = vld [vmem:[#allocation2 + $0x31] sm:$0xff]
    %v1170 = vld [vmem:[#allocation2 + $0x41] sm:$0xff]
    %v1171 = vld [vmem:[#allocation2 + $0x51] sm:$0xff]
    %v1172 = vld [vmem:[#allocation2 + $0x61] sm:$0xff]
    %v1173 = vld [vmem:[#allocation2 + $0x71] sm:$0xff]
    %v1174 = vld [vmem:[#allocation2 + $0x241] sm:$0xff]
    %v1175 = vld [vmem:[#allocation2 + $0x251] sm:$0xff]
    %v1176 = vld [vmem:[#allocation2 + $0x261] sm:$0xff]
    %v1177 = vld [vmem:[#allocation2 + $0x271] sm:$0xff]
    %v1178 = vld [vmem:[#allocation2 + $0x281] sm:$0xff]
    %v1179 = vld [vmem:[#allocation2 + $0x291] sm:$0xff]
    %v1180 = vld [vmem:[#allocation2 + $0x2a1] sm:$0xff]
    %v1181 = vld [vmem:[#allocation2 + $0x2b1] sm:$0xff]
    %v1182 = vld [vmem:[%s2 + $0x40] sm:$0xff]
    %v1183 = vld [vmem:[%s2 + $0x48] sm:$0xff]
    %v1184 = vld [vmem:[%s2 + $0x50] sm:$0xff]
    %v1185 = vld [vmem:[%s2 + $0x58] sm:$0xff]
    %v1187 = vsel %vm86, %v1166, 0
    %v1190 = vsel %vm86, %v1167, 0
    %v1193 = vsel %vm86, %v1168, 0
    %v1196 = vsel %vm86, %v1169, 0
    %v1199 = vsel %vm86, %v1170, 0
    %v1202 = vsel %vm86, %v1171, 0
    %v1205 = vsel %vm86, %v1172, 0
    %v1208 = vsel %vm86, %v1173, 0
    %v1211 = vsel %vm86, %v1174, 0
    %v1214 = vsel %vm86, %v1175, 0
    %v1217 = vsel %vm86, %v1176, 0
    %v1220 = vsel %vm86, %v1177, 0
    %v1223 = vsel %vm86, %v1178, 0
    %v1226 = vsel %vm86, %v1179, 0
    %v1229 = vsel %vm86, %v1180, 0
    %v1232 = vsel %vm86, %v1181, 0
    %1234 = vmatpush.msra.mxu0 0.0
    %1235 = vmatpush.msra.mxu0 0.0
    %1236 = vmatpush.msra.mxu0 0.0
    %1237 = vmatpush.msra.mxu0 0.0
    %1238 = vmatpush.msra.mxu0 0.0
    %1239 = vmatpush.msra.mxu0 0.0
    %1240 = vmatpush.msra.mxu0 0.0
    %1241 = vmatpush.msra.mxu0 0.0
    %1242 = vmatpush.msra.mxu0 0.0
    %1243 = vmatpush.msra.mxu0 0.0
    %1244 = vmatpush.msra.mxu0 0.0
    %1245 = vmatpush.msra.mxu0 0.0
    %1246 = vmatpush.msra.mxu0 %v1185
    %1247 = vmatpush.msra.mxu0 %v1184
    %1248 = vmatpush.msra.mxu0 %v1183
    %1249 = vmatpush.msra.mxu0 %v1182
    %1250 = vmatmul.f32.gmra.mxu0 %v1187
    %v1251 = vpop.f32.mrf.mxu0
    %v1252 = vadd.f32 0.0, %v1251
    %1253 = vmatmul.f32.gmra.mxu0 %v1190
    %v1254 = vpop.f32.mrf.mxu0
    %v1255 = vadd.f32 0.0, %v1254
    %1256 = vmatmul.f32.gmra.mxu0 %v1193
    %v1257 = vpop.f32.mrf.mxu0
    %v1258 = vadd.f32 0.0, %v1257
    %1259 = vmatmul.f32.gmra.mxu0 %v1196
    %v1260 = vpop.f32.mrf.mxu0
    %v1261 = vadd.f32 0.0, %v1260
    %1262 = vmatmul.f32.gmra.mxu0 %v1199
    %v1263 = vpop.f32.mrf.mxu0
    %v1264 = vadd.f32 0.0, %v1263
    %1265 = vmatmul.f32.gmra.mxu0 %v1202
    %v1266 = vpop.f32.mrf.mxu0
    %v1267 = vadd.f32 0.0, %v1266
    %1268 = vmatmul.f32.gmra.mxu0 %v1205
    %v1269 = vpop.f32.mrf.mxu0
    %v1270 = vadd.f32 0.0, %v1269
    %1271 = vmatmul.f32.gmra.mxu0 %v1208
    %v1272 = vpop.f32.mrf.mxu0
    %v1273 = vadd.f32 0.0, %v1272
    %1274 = vmatmul.f32.gmra.mxu0 %v1211
    %v1275 = vpop.f32.mrf.mxu0
    %v1276 = vadd.f32 0.0, %v1275
    %1277 = vmatmul.f32.gmra.mxu0 %v1214
    %v1278 = vpop.f32.mrf.mxu0
    %v1279 = vadd.f32 0.0, %v1278
    %1280 = vmatmul.f32.gmra.mxu0 %v1217
    %v1281 = vpop.f32.mrf.mxu0
    %v1282 = vadd.f32 0.0, %v1281
    %1283 = vmatmul.f32.gmra.mxu0 %v1220
    %v1284 = vpop.f32.mrf.mxu0
    %v1285 = vadd.f32 0.0, %v1284
    %1286 = vmatmul.f32.gmra.mxu0 %v1223
    %v1287 = vpop.f32.mrf.mxu0
    %v1288 = vadd.f32 0.0, %v1287
    %1289 = vmatmul.f32.gmra.mxu0 %v1226
    %v1290 = vpop.f32.mrf.mxu0
    %v1291 = vadd.f32 0.0, %v1290
    %1292 = vmatmul.f32.gmra.mxu0 %v1229
    %v1293 = vpop.f32.mrf.mxu0
    %v1294 = vadd.f32 0.0, %v1293
    %1295 = vmatmul.f32.gmra.mxu0 %v1232
    %v1296 = vpop.f32.mrf.mxu0
    %v1297 = vadd.f32 0.0, %v1296
    %1298 = vdwg.mxu0
    %v1299 = vadd.f32 %v1119, %v1252
    %v1300 = vadd.f32 %v1122, %v1255
    %v1301 = vadd.f32 %v1125, %v1258
    %v1302 = vadd.f32 %v1128, %v1261
    %v1303 = vadd.f32 %v1131, %v1264
    %v1304 = vadd.f32 %v1134, %v1267
    %v1305 = vadd.f32 %v1137, %v1270
    %v1306 = vadd.f32 %v1140, %v1273
    %v1307 = vadd.f32 %v1143, %v1276
    %v1308 = vadd.f32 %v1146, %v1279
    %v1309 = vadd.f32 %v1149, %v1282
    %v1310 = vadd.f32 %v1152, %v1285
    %v1311 = vadd.f32 %v1155, %v1288
    %v1312 = vadd.f32 %v1158, %v1291
    %v1313 = vadd.f32 %v1161, %v1294
    %v1314 = vadd.f32 %v1164, %v1297
    %v1315 = vld [vmem:[%s865] sm:$0xff]
    %v1316 = vld [vmem:[%s865 + $0x10] sm:$0xff]
    %v1317 = vld [vmem:[%s865 + $0x20] sm:$0xff]
    %v1318 = vld [vmem:[%s865 + $0x30] sm:$0xff]
    %v1319 = vld [vmem:[%s865 + $0x40] sm:$0xff]
    %v1320 = vld [vmem:[%s865 + $0x50] sm:$0xff]
    %v1321 = vld [vmem:[%s865 + $0x60] sm:$0xff]
    %v1322 = vld [vmem:[%s865 + $0x70] sm:$0xff]
    %v1323 = vld [vmem:[%s865 + $0x240] sm:$0xff]
    %v1324 = vld [vmem:[%s865 + $0x250] sm:$0xff]
    %v1325 = vld [vmem:[%s865 + $0x260] sm:$0xff]
    %v1326 = vld [vmem:[%s865 + $0x270] sm:$0xff]
    %v1327 = vld [vmem:[%s865 + $0x280] sm:$0xff]
    %v1328 = vld [vmem:[%s865 + $0x290] sm:$0xff]
    %v1329 = vld [vmem:[%s865 + $0x2a0] sm:$0xff]
    %v1330 = vld [vmem:[%s865 + $0x2b0] sm:$0xff]
    %v1331 = vld [vmem:[%s2 + $0x60] sm:$0xff]
    %v1332 = vld [vmem:[%s2 + $0x68] sm:$0xff]
    %v1333 = vld [vmem:[%s2 + $0x70] sm:$0xff]
    %v1334 = vld [vmem:[%s2 + $0x78] sm:$0xff]
    %v1336 = vsel %vm86, %v1315, 0
    %v1339 = vsel %vm86, %v1316, 0
    %v1342 = vsel %vm86, %v1317, 0
    %v1345 = vsel %vm86, %v1318, 0
    %v1348 = vsel %vm86, %v1319, 0
    %v1351 = vsel %vm86, %v1320, 0
    %v1354 = vsel %vm86, %v1321, 0
    %v1357 = vsel %vm86, %v1322, 0
    %v1360 = vsel %vm86, %v1323, 0
    %v1363 = vsel %vm86, %v1324, 0
    %v1366 = vsel %vm86, %v1325, 0
    %v1369 = vsel %vm86, %v1326, 0
    %v1372 = vsel %vm86, %v1327, 0
    %v1375 = vsel %vm86, %v1328, 0
    %v1378 = vsel %vm86, %v1329, 0
    %v1381 = vsel %vm86, %v1330, 0
    %1383 = vmatpush.msra.mxu0 0.0
    %1384 = vmatpush.msra.mxu0 0.0
    %1385 = vmatpush.msra.mxu0 0.0
    %1386 = vmatpush.msra.mxu0 0.0
    %1387 = vmatpush.msra.mxu0 0.0
    %1388 = vmatpush.msra.mxu0 0.0
    %1389 = vmatpush.msra.mxu0 0.0
    %1390 = vmatpush.msra.mxu0 0.0
    %1391 = vmatpush.msra.mxu0 0.0
    %1392 = vmatpush.msra.mxu0 0.0
    %1393 = vmatpush.msra.mxu0 0.0
    %1394 = vmatpush.msra.mxu0 0.0
    %1395 = vmatpush.msra.mxu0 %v1334
    %1396 = vmatpush.msra.mxu0 %v1333
    %1397 = vmatpush.msra.mxu0 %v1332
    %1398 = vmatpush.msra.mxu0 %v1331
    %1399 = vmatmul.f32.gmra.mxu0 %v1336
    %v1400 = vpop.f32.mrf.mxu0
    %v1401 = vadd.f32 0.0, %v1400
    %1402 = vmatmul.f32.gmra.mxu0 %v1339
    %v1403 = vpop.f32.mrf.mxu0
    %v1404 = vadd.f32 0.0, %v1403
    %1405 = vmatmul.f32.gmra.mxu0 %v1342
    %v1406 = vpop.f32.mrf.mxu0
    %v1407 = vadd.f32 0.0, %v1406
    %1408 = vmatmul.f32.gmra.mxu0 %v1345
    %v1409 = vpop.f32.mrf.mxu0
    %v1410 = vadd.f32 0.0, %v1409
    %1411 = vmatmul.f32.gmra.mxu0 %v1348
    %v1412 = vpop.f32.mrf.mxu0
    %v1413 = vadd.f32 0.0, %v1412
    %1414 = vmatmul.f32.gmra.mxu0 %v1351
    %v1415 = vpop.f32.mrf.mxu0
    %v1416 = vadd.f32 0.0, %v1415
    %1417 = vmatmul.f32.gmra.mxu0 %v1354
    %v1418 = vpop.f32.mrf.mxu0
    %v1419 = vadd.f32 0.0, %v1418
    %1420 = vmatmul.f32.gmra.mxu0 %v1357
    %v1421 = vpop.f32.mrf.mxu0
    %v1422 = vadd.f32 0.0, %v1421
    %1423 = vmatmul.f32.gmra.mxu0 %v1360
    %v1424 = vpop.f32.mrf.mxu0
    %v1425 = vadd.f32 0.0, %v1424
    %1426 = vmatmul.f32.gmra.mxu0 %v1363
    %v1427 = vpop.f32.mrf.mxu0
    %v1428 = vadd.f32 0.0, %v1427
    %1429 = vmatmul.f32.gmra.mxu0 %v1366
    %v1430 = vpop.f32.mrf.mxu0
    %v1431 = vadd.f32 0.0, %v1430
    %1432 = vmatmul.f32.gmra.mxu0 %v1369
    %v1433 = vpop.f32.mrf.mxu0
    %v1434 = vadd.f32 0.0, %v1433
    %1435 = vmatmul.f32.gmra.mxu0 %v1372
    %v1436 = vpop.f32.mrf.mxu0
    %v1437 = vadd.f32 0.0, %v1436
    %1438 = vmatmul.f32.gmra.mxu0 %v1375
    %v1439 = vpop.f32.mrf.mxu0
    %v1440 = vadd.f32 0.0, %v1439
    %1441 = vmatmul.f32.gmra.mxu0 %v1378
    %v1442 = vpop.f32.mrf.mxu0
    %v1443 = vadd.f32 0.0, %v1442
    %1444 = vmatmul.f32.gmra.mxu0 %v1381
    %v1445 = vpop.f32.mrf.mxu0
    %v1446 = vadd.f32 0.0, %v1445
    %1447 = vdwg.mxu0
    %v1448 = vadd.f32 %v1299, %v1401
    %v1449 = vadd.f32 %v1300, %v1404
    %v1450 = vadd.f32 %v1301, %v1407
    %v1451 = vadd.f32 %v1302, %v1410
    %v1452 = vadd.f32 %v1303, %v1413
    %v1453 = vadd.f32 %v1304, %v1416
    %v1454 = vadd.f32 %v1305, %v1419
    %v1455 = vadd.f32 %v1306, %v1422
    %v1456 = vadd.f32 %v1307, %v1425
    %v1457 = vadd.f32 %v1308, %v1428
    %v1458 = vadd.f32 %v1309, %v1431
    %v1459 = vadd.f32 %v1310, %v1434
    %v1460 = vadd.f32 %v1311, %v1437
    %v1461 = vadd.f32 %v1312, %v1440
    %v1462 = vadd.f32 %v1313, %v1443
    %v1463 = vadd.f32 %v1314, %v1446
    %v1464 = vld [vmem:[%s882] sm:$0xff]
    %v1465 = vld [vmem:[%s882 + $0x10] sm:$0xff]
    %v1466 = vld [vmem:[%s882 + $0x20] sm:$0xff]
    %v1467 = vld [vmem:[%s882 + $0x30] sm:$0xff]
    %v1468 = vld [vmem:[%s882 + $0x40] sm:$0xff]
    %v1469 = vld [vmem:[%s882 + $0x50] sm:$0xff]
    %v1470 = vld [vmem:[%s882 + $0x60] sm:$0xff]
    %v1471 = vld [vmem:[%s882 + $0x70] sm:$0xff]
    %v1472 = vld [vmem:[%s882 + $0x240] sm:$0xff]
    %v1473 = vld [vmem:[%s882 + $0x250] sm:$0xff]
    %v1474 = vld [vmem:[%s882 + $0x260] sm:$0xff]
    %v1475 = vld [vmem:[%s882 + $0x270] sm:$0xff]
    %v1476 = vld [vmem:[%s882 + $0x280] sm:$0xff]
    %v1477 = vld [vmem:[%s882 + $0x290] sm:$0xff]
    %v1478 = vld [vmem:[%s882 + $0x2a0] sm:$0xff]
    %v1479 = vld [vmem:[%s882 + $0x2b0] sm:$0xff]
    %v1480 = vld [vmem:[%s2 + $0x80] sm:$0xff]
    %v1481 = vld [vmem:[%s2 + $0x88] sm:$0xff]
    %v1482 = vld [vmem:[%s2 + $0x90] sm:$0xff]
    %v1483 = vld [vmem:[%s2 + $0x98] sm:$0xff]
    %v1485 = vsel %vm86, %v1464, 0
    %v1488 = vsel %vm86, %v1465, 0
    %v1491 = vsel %vm86, %v1466, 0
    %v1494 = vsel %vm86, %v1467, 0
    %v1497 = vsel %vm86, %v1468, 0
    %v1500 = vsel %vm86, %v1469, 0
    %v1503 = vsel %vm86, %v1470, 0
    %v1506 = vsel %vm86, %v1471, 0
    %v1509 = vsel %vm86, %v1472, 0
    %v1512 = vsel %vm86, %v1473, 0
    %v1515 = vsel %vm86, %v1474, 0
    %v1518 = vsel %vm86, %v1475, 0
    %v1521 = vsel %vm86, %v1476, 0
    %v1524 = vsel %vm86, %v1477, 0
    %v1527 = vsel %vm86, %v1478, 0
    %v1530 = vsel %vm86, %v1479, 0
    %1532 = vmatpush.msra.mxu0 0.0
    %1533 = vmatpush.msra.mxu0 0.0
    %1534 = vmatpush.msra.mxu0 0.0
    %1535 = vmatpush.msra.mxu0 0.0
    %1536 = vmatpush.msra.mxu0 0.0
    %1537 = vmatpush.msra.mxu0 0.0
    %1538 = vmatpush.msra.mxu0 0.0
    %1539 = vmatpush.msra.mxu0 0.0
    %1540 = vmatpush.msra.mxu0 0.0
    %1541 = vmatpush.msra.mxu0 0.0
    %1542 = vmatpush.msra.mxu0 0.0
    %1543 = vmatpush.msra.mxu0 0.0
    %1544 = vmatpush.msra.mxu0 %v1483
    %1545 = vmatpush.msra.mxu0 %v1482
    %1546 = vmatpush.msra.mxu0 %v1481
    %1547 = vmatpush.msra.mxu0 %v1480
    %1548 = vmatmul.f32.gmra.mxu0 %v1485
    %v1549 = vpop.f32.mrf.mxu0
    %v1550 = vadd.f32 0.0, %v1549
    %1551 = vmatmul.f32.gmra.mxu0 %v1488
    %v1552 = vpop.f32.mrf.mxu0
    %v1553 = vadd.f32 0.0, %v1552
    %1554 = vmatmul.f32.gmra.mxu0 %v1491
    %v1555 = vpop.f32.mrf.mxu0
    %v1556 = vadd.f32 0.0, %v1555
    %1557 = vmatmul.f32.gmra.mxu0 %v1494
    %v1558 = vpop.f32.mrf.mxu0
    %v1559 = vadd.f32 0.0, %v1558
    %1560 = vmatmul.f32.gmra.mxu0 %v1497
    %v1561 = vpop.f32.mrf.mxu0
    %v1562 = vadd.f32 0.0, %v1561
    %1563 = vmatmul.f32.gmra.mxu0 %v1500
    %v1564 = vpop.f32.mrf.mxu0
    %v1565 = vadd.f32 0.0, %v1564
    %1566 = vmatmul.f32.gmra.mxu0 %v1503
    %v1567 = vpop.f32.mrf.mxu0
    %v1568 = vadd.f32 0.0, %v1567
    %1569 = vmatmul.f32.gmra.mxu0 %v1506
    %v1570 = vpop.f32.mrf.mxu0
    %v1571 = vadd.f32 0.0, %v1570
    %1572 = vmatmul.f32.gmra.mxu0 %v1509
    %v1573 = vpop.f32.mrf.mxu0
    %v1574 = vadd.f32 0.0, %v1573
    %1575 = vmatmul.f32.gmra.mxu0 %v1512
    %v1576 = vpop.f32.mrf.mxu0
    %v1577 = vadd.f32 0.0, %v1576
    %1578 = vmatmul.f32.gmra.mxu0 %v1515
    %v1579 = vpop.f32.mrf.mxu0
    %v1580 = vadd.f32 0.0, %v1579
    %1581 = vmatmul.f32.gmra.mxu0 %v1518
    %v1582 = vpop.f32.mrf.mxu0
    %v1583 = vadd.f32 0.0, %v1582
    %1584 = vmatmul.f32.gmra.mxu0 %v1521
    %v1585 = vpop.f32.mrf.mxu0
    %v1586 = vadd.f32 0.0, %v1585
    %1587 = vmatmul.f32.gmra.mxu0 %v1524
    %v1588 = vpop.f32.mrf.mxu0
    %v1589 = vadd.f32 0.0, %v1588
    %1590 = vmatmul.f32.gmra.mxu0 %v1527
    %v1591 = vpop.f32.mrf.mxu0
    %v1592 = vadd.f32 0.0, %v1591
    %1593 = vmatmul.f32.gmra.mxu0 %v1530
    %v1594 = vpop.f32.mrf.mxu0
    %v1595 = vadd.f32 0.0, %v1594
    %1596 = vdwg.mxu0
    %v1597 = vadd.f32 %v1448, %v1550
    %v1598 = vadd.f32 %v1449, %v1553
    %v1599 = vadd.f32 %v1450, %v1556
    %v1600 = vadd.f32 %v1451, %v1559
    %v1601 = vadd.f32 %v1452, %v1562
    %v1602 = vadd.f32 %v1453, %v1565
    %v1603 = vadd.f32 %v1454, %v1568
    %v1604 = vadd.f32 %v1455, %v1571
    %v1605 = vadd.f32 %v1456, %v1574
    %v1606 = vadd.f32 %v1457, %v1577
    %v1607 = vadd.f32 %v1458, %v1580
    %v1608 = vadd.f32 %v1459, %v1583
    %v1609 = vadd.f32 %v1460, %v1586
    %v1610 = vadd.f32 %v1461, %v1589
    %v1611 = vadd.f32 %v1462, %v1592
    %v1612 = vadd.f32 %v1463, %v1595
    %v1613 = vld [vmem:[%s865 + $0x1] sm:$0xff]
    %v1614 = vld [vmem:[%s865 + $0x11] sm:$0xff]
    %v1615 = vld [vmem:[%s865 + $0x21] sm:$0xff]
    %v1616 = vld [vmem:[%s865 + $0x31] sm:$0xff]
    %v1617 = vld [vmem:[%s865 + $0x41] sm:$0xff]
    %v1618 = vld [vmem:[%s865 + $0x51] sm:$0xff]
    %v1619 = vld [vmem:[%s865 + $0x61] sm:$0xff]
    %v1620 = vld [vmem:[%s865 + $0x71] sm:$0xff]
    %v1621 = vld [vmem:[%s865 + $0x241] sm:$0xff]
    %v1622 = vld [vmem:[%s865 + $0x251] sm:$0xff]
    %v1623 = vld [vmem:[%s865 + $0x261] sm:$0xff]
    %v1624 = vld [vmem:[%s865 + $0x271] sm:$0xff]
    %v1625 = vld [vmem:[%s865 + $0x281] sm:$0xff]
    %v1626 = vld [vmem:[%s865 + $0x291] sm:$0xff]
    %v1627 = vld [vmem:[%s865 + $0x2a1] sm:$0xff]
    %v1628 = vld [vmem:[%s865 + $0x2b1] sm:$0xff]
    %v1629 = vld [vmem:[%s2 + $0xa0] sm:$0xff]
    %v1630 = vld [vmem:[%s2 + $0xa8] sm:$0xff]
    %v1631 = vld [vmem:[%s2 + $0xb0] sm:$0xff]
    %v1632 = vld [vmem:[%s2 + $0xb8] sm:$0xff]
    %v1634 = vsel %vm86, %v1613, 0
    %v1637 = vsel %vm86, %v1614, 0
    %v1640 = vsel %vm86, %v1615, 0
    %v1643 = vsel %vm86, %v1616, 0
    %v1646 = vsel %vm86, %v1617, 0
    %v1649 = vsel %vm86, %v1618, 0
    %v1652 = vsel %vm86, %v1619, 0
    %v1655 = vsel %vm86, %v1620, 0
    %v1658 = vsel %vm86, %v1621, 0
    %v1661 = vsel %vm86, %v1622, 0
    %v1664 = vsel %vm86, %v1623, 0
    %v1667 = vsel %vm86, %v1624, 0
    %v1670 = vsel %vm86, %v1625, 0
    %v1673 = vsel %vm86, %v1626, 0
    %v1676 = vsel %vm86, %v1627, 0
    %v1679 = vsel %vm86, %v1628, 0
    %1681 = vmatpush.msra.mxu0 0.0
    %1682 = vmatpush.msra.mxu0 0.0
    %1683 = vmatpush.msra.mxu0 0.0
    %1684 = vmatpush.msra.mxu0 0.0
    %1685 = vmatpush.msra.mxu0 0.0
    %1686 = vmatpush.msra.mxu0 0.0
    %1687 = vmatpush.msra.mxu0 0.0
    %1688 = vmatpush.msra.mxu0 0.0
    %1689 = vmatpush.msra.mxu0 0.0
    %1690 = vmatpush.msra.mxu0 0.0
    %1691 = vmatpush.msra.mxu0 0.0
    %1692 = vmatpush.msra.mxu0 0.0
    %1693 = vmatpush.msra.mxu0 %v1632
    %1694 = vmatpush.msra.mxu0 %v1631
    %1695 = vmatpush.msra.mxu0 %v1630
    %1696 = vmatpush.msra.mxu0 %v1629
    %1697 = vmatmul.f32.gmra.mxu0 %v1634
    %v1698 = vpop.f32.mrf.mxu0
    %v1699 = vadd.f32 0.0, %v1698
    %1700 = vmatmul.f32.gmra.mxu0 %v1637
    %v1701 = vpop.f32.mrf.mxu0
    %v1702 = vadd.f32 0.0, %v1701
    %1703 = vmatmul.f32.gmra.mxu0 %v1640
    %v1704 = vpop.f32.mrf.mxu0
    %v1705 = vadd.f32 0.0, %v1704
    %1706 = vmatmul.f32.gmra.mxu0 %v1643
    %v1707 = vpop.f32.mrf.mxu0
    %v1708 = vadd.f32 0.0, %v1707
    %1709 = vmatmul.f32.gmra.mxu0 %v1646
    %v1710 = vpop.f32.mrf.mxu0
    %v1711 = vadd.f32 0.0, %v1710
    %1712 = vmatmul.f32.gmra.mxu0 %v1649
    %v1713 = vpop.f32.mrf.mxu0
    %v1714 = vadd.f32 0.0, %v1713
    %1715 = vmatmul.f32.gmra.mxu0 %v1652
    %v1716 = vpop.f32.mrf.mxu0
    %v1717 = vadd.f32 0.0, %v1716
    %1718 = vmatmul.f32.gmra.mxu0 %v1655
    %v1719 = vpop.f32.mrf.mxu0
    %v1720 = vadd.f32 0.0, %v1719
    %1721 = vmatmul.f32.gmra.mxu0 %v1658
    %v1722 = vpop.f32.mrf.mxu0
    %v1723 = vadd.f32 0.0, %v1722
    %1724 = vmatmul.f32.gmra.mxu0 %v1661
    %v1725 = vpop.f32.mrf.mxu0
    %v1726 = vadd.f32 0.0, %v1725
    %1727 = vmatmul.f32.gmra.mxu0 %v1664
    %v1728 = vpop.f32.mrf.mxu0
    %v1729 = vadd.f32 0.0, %v1728
    %1730 = vmatmul.f32.gmra.mxu0 %v1667
    %v1731 = vpop.f32.mrf.mxu0
    %v1732 = vadd.f32 0.0, %v1731
    %1733 = vmatmul.f32.gmra.mxu0 %v1670
    %v1734 = vpop.f32.mrf.mxu0
    %v1735 = vadd.f32 0.0, %v1734
    %1736 = vmatmul.f32.gmra.mxu0 %v1673
    %v1737 = vpop.f32.mrf.mxu0
    %v1738 = vadd.f32 0.0, %v1737
    %1739 = vmatmul.f32.gmra.mxu0 %v1676
    %v1740 = vpop.f32.mrf.mxu0
    %v1741 = vadd.f32 0.0, %v1740
    %1742 = vmatmul.f32.gmra.mxu0 %v1679
    %v1743 = vpop.f32.mrf.mxu0
    %v1744 = vadd.f32 0.0, %v1743
    %1745 = vdwg.mxu0
    %v1746 = vadd.f32 %v1597, %v1699
    %v1747 = vadd.f32 %v1598, %v1702
    %v1748 = vadd.f32 %v1599, %v1705
    %v1749 = vadd.f32 %v1600, %v1708
    %v1750 = vadd.f32 %v1601, %v1711
    %v1751 = vadd.f32 %v1602, %v1714
    %v1752 = vadd.f32 %v1603, %v1717
    %v1753 = vadd.f32 %v1604, %v1720
    %v1754 = vadd.f32 %v1605, %v1723
    %v1755 = vadd.f32 %v1606, %v1726
    %v1756 = vadd.f32 %v1607, %v1729
    %v1757 = vadd.f32 %v1608, %v1732
    %v1758 = vadd.f32 %v1609, %v1735
    %v1759 = vadd.f32 %v1610, %v1738
    %v1760 = vadd.f32 %v1611, %v1741
    %v1761 = vadd.f32 %v1612, %v1744
    %v1762 = vld [vmem:[%s831] sm:$0xff]
    %v1763 = vld [vmem:[%s831 + $0x10] sm:$0xff]
    %v1764 = vld [vmem:[%s831 + $0x20] sm:$0xff]
    %v1765 = vld [vmem:[%s831 + $0x30] sm:$0xff]
    %v1766 = vld [vmem:[%s831 + $0x40] sm:$0xff]
    %v1767 = vld [vmem:[%s831 + $0x50] sm:$0xff]
    %v1768 = vld [vmem:[%s831 + $0x60] sm:$0xff]
    %v1769 = vld [vmem:[%s831 + $0x70] sm:$0xff]
    %v1770 = vld [vmem:[%s831 + $0x240] sm:$0xff]
    %v1771 = vld [vmem:[%s831 + $0x250] sm:$0xff]
    %v1772 = vld [vmem:[%s831 + $0x260] sm:$0xff]
    %v1773 = vld [vmem:[%s831 + $0x270] sm:$0xff]
    %v1774 = vld [vmem:[%s831 + $0x280] sm:$0xff]
    %v1775 = vld [vmem:[%s831 + $0x290] sm:$0xff]
    %v1776 = vld [vmem:[%s831 + $0x2a0] sm:$0xff]
    %v1777 = vld [vmem:[%s831 + $0x2b0] sm:$0xff]
    %v1778 = vld [vmem:[%s2 + $0xc0] sm:$0xff]
    %v1779 = vld [vmem:[%s2 + $0xc8] sm:$0xff]
    %v1780 = vld [vmem:[%s2 + $0xd0] sm:$0xff]
    %v1781 = vld [vmem:[%s2 + $0xd8] sm:$0xff]
    %v1783 = vsel %vm86, %v1762, 0
    %v1786 = vsel %vm86, %v1763, 0
    %v1789 = vsel %vm86, %v1764, 0
    %v1792 = vsel %vm86, %v1765, 0
    %v1795 = vsel %vm86, %v1766, 0
    %v1798 = vsel %vm86, %v1767, 0
    %v1801 = vsel %vm86, %v1768, 0
    %v1804 = vsel %vm86, %v1769, 0
    %v1807 = vsel %vm86, %v1770, 0
    %v1810 = vsel %vm86, %v1771, 0
    %v1813 = vsel %vm86, %v1772, 0
    %v1816 = vsel %vm86, %v1773, 0
    %v1819 = vsel %vm86, %v1774, 0
    %v1822 = vsel %vm86, %v1775, 0
    %v1825 = vsel %vm86, %v1776, 0
    %v1828 = vsel %vm86, %v1777, 0
    %1830 = vmatpush.msra.mxu0 0.0
    %1831 = vmatpush.msra.mxu0 0.0
    %1832 = vmatpush.msra.mxu0 0.0
    %1833 = vmatpush.msra.mxu0 0.0
    %1834 = vmatpush.msra.mxu0 0.0
    %1835 = vmatpush.msra.mxu0 0.0
    %1836 = vmatpush.msra.mxu0 0.0
    %1837 = vmatpush.msra.mxu0 0.0
    %1838 = vmatpush.msra.mxu0 0.0
    %1839 = vmatpush.msra.mxu0 0.0
    %1840 = vmatpush.msra.mxu0 0.0
    %1841 = vmatpush.msra.mxu0 0.0
    %1842 = vmatpush.msra.mxu0 %v1781
    %1843 = vmatpush.msra.mxu0 %v1780
    %1844 = vmatpush.msra.mxu0 %v1779
    %1845 = vmatpush.msra.mxu0 %v1778
    %1846 = vmatmul.f32.gmra.mxu0 %v1783
    %v1847 = vpop.f32.mrf.mxu0
    %v1848 = vadd.f32 0.0, %v1847
    %1849 = vmatmul.f32.gmra.mxu0 %v1786
    %v1850 = vpop.f32.mrf.mxu0
    %v1851 = vadd.f32 0.0, %v1850
    %1852 = vmatmul.f32.gmra.mxu0 %v1789
    %v1853 = vpop.f32.mrf.mxu0
    %v1854 = vadd.f32 0.0, %v1853
    %1855 = vmatmul.f32.gmra.mxu0 %v1792
    %v1856 = vpop.f32.mrf.mxu0
    %v1857 = vadd.f32 0.0, %v1856
    %1858 = vmatmul.f32.gmra.mxu0 %v1795
    %v1859 = vpop.f32.mrf.mxu0
    %v1860 = vadd.f32 0.0, %v1859
    %1861 = vmatmul.f32.gmra.mxu0 %v1798
    %v1862 = vpop.f32.mrf.mxu0
    %v1863 = vadd.f32 0.0, %v1862
    %1864 = vmatmul.f32.gmra.mxu0 %v1801
    %v1865 = vpop.f32.mrf.mxu0
    %v1866 = vadd.f32 0.0, %v1865
    %1867 = vmatmul.f32.gmra.mxu0 %v1804
    %v1868 = vpop.f32.mrf.mxu0
    %v1869 = vadd.f32 0.0, %v1868
    %1870 = vmatmul.f32.gmra.mxu0 %v1807
    %v1871 = vpop.f32.mrf.mxu0
    %v1872 = vadd.f32 0.0, %v1871
    %1873 = vmatmul.f32.gmra.mxu0 %v1810
    %v1874 = vpop.f32.mrf.mxu0
    %v1875 = vadd.f32 0.0, %v1874
    %1876 = vmatmul.f32.gmra.mxu0 %v1813
    %v1877 = vpop.f32.mrf.mxu0
    %v1878 = vadd.f32 0.0, %v1877
    %1879 = vmatmul.f32.gmra.mxu0 %v1816
    %v1880 = vpop.f32.mrf.mxu0
    %v1881 = vadd.f32 0.0, %v1880
    %1882 = vmatmul.f32.gmra.mxu0 %v1819
    %v1883 = vpop.f32.mrf.mxu0
    %v1884 = vadd.f32 0.0, %v1883
    %1885 = vmatmul.f32.gmra.mxu0 %v1822
    %v1886 = vpop.f32.mrf.mxu0
    %v1887 = vadd.f32 0.0, %v1886
    %1888 = vmatmul.f32.gmra.mxu0 %v1825
    %v1889 = vpop.f32.mrf.mxu0
    %v1890 = vadd.f32 0.0, %v1889
    %1891 = vmatmul.f32.gmra.mxu0 %v1828
    %v1892 = vpop.f32.mrf.mxu0
    %v1893 = vadd.f32 0.0, %v1892
    %1894 = vdwg.mxu0
    %v1895 = vadd.f32 %v1746, %v1848
    %v1896 = vadd.f32 %v1747, %v1851
    %v1897 = vadd.f32 %v1748, %v1854
    %v1898 = vadd.f32 %v1749, %v1857
    %v1899 = vadd.f32 %v1750, %v1860
    %v1900 = vadd.f32 %v1751, %v1863
    %v1901 = vadd.f32 %v1752, %v1866
    %v1902 = vadd.f32 %v1753, %v1869
    %v1903 = vadd.f32 %v1754, %v1872
    %v1904 = vadd.f32 %v1755, %v1875
    %v1905 = vadd.f32 %v1756, %v1878
    %v1906 = vadd.f32 %v1757, %v1881
    %v1907 = vadd.f32 %v1758, %v1884
    %v1908 = vadd.f32 %v1759, %v1887
    %v1909 = vadd.f32 %v1760, %v1890
    %v1910 = vadd.f32 %v1761, %v1893
    %v1911 = vld [vmem:[%s848] sm:$0xff]
    %v1912 = vld [vmem:[%s848 + $0x10] sm:$0xff]
    %v1913 = vld [vmem:[%s848 + $0x20] sm:$0xff]
    %v1914 = vld [vmem:[%s848 + $0x30] sm:$0xff]
    %v1915 = vld [vmem:[%s848 + $0x40] sm:$0xff]
    %v1916 = vld [vmem:[%s848 + $0x50] sm:$0xff]
    %v1917 = vld [vmem:[%s848 + $0x60] sm:$0xff]
    %v1918 = vld [vmem:[%s848 + $0x70] sm:$0xff]
    %v1919 = vld [vmem:[%s848 + $0x240] sm:$0xff]
    %v1920 = vld [vmem:[%s848 + $0x250] sm:$0xff]
    %v1921 = vld [vmem:[%s848 + $0x260] sm:$0xff]
    %v1922 = vld [vmem:[%s848 + $0x270] sm:$0xff]
    %v1923 = vld [vmem:[%s848 + $0x280] sm:$0xff]
    %v1924 = vld [vmem:[%s848 + $0x290] sm:$0xff]
    %v1925 = vld [vmem:[%s848 + $0x2a0] sm:$0xff]
    %v1926 = vld [vmem:[%s848 + $0x2b0] sm:$0xff]
    %v1927 = vld [vmem:[%s2 + $0xe0] sm:$0xff]
    %v1928 = vld [vmem:[%s2 + $0xe8] sm:$0xff]
    %v1929 = vld [vmem:[%s2 + $0xf0] sm:$0xff]
    %v1930 = vld [vmem:[%s2 + $0xf8] sm:$0xff]
    %v1932 = vsel %vm86, %v1911, 0
    %v1935 = vsel %vm86, %v1912, 0
    %v1938 = vsel %vm86, %v1913, 0
    %v1941 = vsel %vm86, %v1914, 0
    %v1944 = vsel %vm86, %v1915, 0
    %v1947 = vsel %vm86, %v1916, 0
    %v1950 = vsel %vm86, %v1917, 0
    %v1953 = vsel %vm86, %v1918, 0
    %v1956 = vsel %vm86, %v1919, 0
    %v1959 = vsel %vm86, %v1920, 0
    %v1962 = vsel %vm86, %v1921, 0
    %v1965 = vsel %vm86, %v1922, 0
    %v1968 = vsel %vm86, %v1923, 0
    %v1971 = vsel %vm86, %v1924, 0
    %v1974 = vsel %vm86, %v1925, 0
    %v1977 = vsel %vm86, %v1926, 0
    %1979 = vmatpush.msra.mxu0 0.0
    %1980 = vmatpush.msra.mxu0 0.0
    %1981 = vmatpush.msra.mxu0 0.0
    %1982 = vmatpush.msra.mxu0 0.0
    %1983 = vmatpush.msra.mxu0 0.0
    %1984 = vmatpush.msra.mxu0 0.0
    %1985 = vmatpush.msra.mxu0 0.0
    %1986 = vmatpush.msra.mxu0 0.0
    %1987 = vmatpush.msra.mxu0 0.0
    %1988 = vmatpush.msra.mxu0 0.0
    %1989 = vmatpush.msra.mxu0 0.0
    %1990 = vmatpush.msra.mxu0 0.0
    %1991 = vmatpush.msra.mxu0 %v1930
    %1992 = vmatpush.msra.mxu0 %v1929
    %1993 = vmatpush.msra.mxu0 %v1928
    %1994 = vmatpush.msra.mxu0 %v1927
    %1995 = vmatmul.f32.gmra.mxu0 %v1932
    %v1996 = vpop.f32.mrf.mxu0
    %v1997 = vadd.f32 0.0, %v1996
    %1998 = vmatmul.f32.gmra.mxu0 %v1935
    %v1999 = vpop.f32.mrf.mxu0
    %v2000 = vadd.f32 0.0, %v1999
    %2001 = vmatmul.f32.gmra.mxu0 %v1938
    %v2002 = vpop.f32.mrf.mxu0
    %v2003 = vadd.f32 0.0, %v2002
    %2004 = vmatmul.f32.gmra.mxu0 %v1941
    %v2005 = vpop.f32.mrf.mxu0
    %v2006 = vadd.f32 0.0, %v2005
    %2007 = vmatmul.f32.gmra.mxu0 %v1944
    %v2008 = vpop.f32.mrf.mxu0
    %v2009 = vadd.f32 0.0, %v2008
    %2010 = vmatmul.f32.gmra.mxu0 %v1947
    %v2011 = vpop.f32.mrf.mxu0
    %v2012 = vadd.f32 0.0, %v2011
    %2013 = vmatmul.f32.gmra.mxu0 %v1950
    %v2014 = vpop.f32.mrf.mxu0
    %v2015 = vadd.f32 0.0, %v2014
    %2016 = vmatmul.f32.gmra.mxu0 %v1953
    %v2017 = vpop.f32.mrf.mxu0
    %v2018 = vadd.f32 0.0, %v2017
    %2019 = vmatmul.f32.gmra.mxu0 %v1956
    %v2020 = vpop.f32.mrf.mxu0
    %v2021 = vadd.f32 0.0, %v2020
    %2022 = vmatmul.f32.gmra.mxu0 %v1959
    %v2023 = vpop.f32.mrf.mxu0
    %v2024 = vadd.f32 0.0, %v2023
    %2025 = vmatmul.f32.gmra.mxu0 %v1962
    %v2026 = vpop.f32.mrf.mxu0
    %v2027 = vadd.f32 0.0, %v2026
    %2028 = vmatmul.f32.gmra.mxu0 %v1965
    %v2029 = vpop.f32.mrf.mxu0
    %v2030 = vadd.f32 0.0, %v2029
    %2031 = vmatmul.f32.gmra.mxu0 %v1968
    %v2032 = vpop.f32.mrf.mxu0
    %v2033 = vadd.f32 0.0, %v2032
    %2034 = vmatmul.f32.gmra.mxu0 %v1971
    %v2035 = vpop.f32.mrf.mxu0
    %v2036 = vadd.f32 0.0, %v2035
    %2037 = vmatmul.f32.gmra.mxu0 %v1974
    %v2038 = vpop.f32.mrf.mxu0
    %v2039 = vadd.f32 0.0, %v2038
    %2040 = vmatmul.f32.gmra.mxu0 %v1977
    %v2041 = vpop.f32.mrf.mxu0
    %v2042 = vadd.f32 0.0, %v2041
    %2043 = vdwg.mxu0
    %v2044 = vadd.f32 %v1895, %v1997
    %v2045 = vadd.f32 %v1896, %v2000
    %v2046 = vadd.f32 %v1897, %v2003
    %v2047 = vadd.f32 %v1898, %v2006
    %v2048 = vadd.f32 %v1899, %v2009
    %v2049 = vadd.f32 %v1900, %v2012
    %v2050 = vadd.f32 %v1901, %v2015
    %v2051 = vadd.f32 %v1902, %v2018
    %v2052 = vadd.f32 %v1903, %v2021
    %v2053 = vadd.f32 %v1904, %v2024
    %v2054 = vadd.f32 %v1905, %v2027
    %v2055 = vadd.f32 %v1906, %v2030
    %v2056 = vadd.f32 %v1907, %v2033
    %v2057 = vadd.f32 %v1908, %v2036
    %v2058 = vadd.f32 %v1909, %v2039
    %v2059 = vadd.f32 %v1910, %v2042
    %v2060 = vld [vmem:[%s831 + $0x1] sm:$0xff]
    %v2061 = vld [vmem:[%s831 + $0x11] sm:$0xff]
    %v2062 = vld [vmem:[%s831 + $0x21] sm:$0xff]
    %v2063 = vld [vmem:[%s831 + $0x31] sm:$0xff]
    %v2064 = vld [vmem:[%s831 + $0x41] sm:$0xff]
    %v2065 = vld [vmem:[%s831 + $0x51] sm:$0xff]
    %v2066 = vld [vmem:[%s831 + $0x61] sm:$0xff]
    %v2067 = vld [vmem:[%s831 + $0x71] sm:$0xff]
    %v2068 = vld [vmem:[%s831 + $0x241] sm:$0xff]
    %v2069 = vld [vmem:[%s831 + $0x251] sm:$0xff]
    %v2070 = vld [vmem:[%s831 + $0x261] sm:$0xff]
    %v2071 = vld [vmem:[%s831 + $0x271] sm:$0xff]
    %v2072 = vld [vmem:[%s831 + $0x281] sm:$0xff]
    %v2073 = vld [vmem:[%s831 + $0x291] sm:$0xff]
    %v2074 = vld [vmem:[%s831 + $0x2a1] sm:$0xff]
    %v2075 = vld [vmem:[%s831 + $0x2b1] sm:$0xff]
    %v2076 = vld [vmem:[%s2 + $0x100] sm:$0xff]
    %v2077 = vld [vmem:[%s2 + $0x108] sm:$0xff]
    %v2078 = vld [vmem:[%s2 + $0x110] sm:$0xff]
    %v2079 = vld [vmem:[%s2 + $0x118] sm:$0xff]
    %v2081 = vsel %vm86, %v2060, 0
    %v2084 = vsel %vm86, %v2061, 0
    %v2087 = vsel %vm86, %v2062, 0
    %v2090 = vsel %vm86, %v2063, 0
    %v2093 = vsel %vm86, %v2064, 0
    %v2096 = vsel %vm86, %v2065, 0
    %v2099 = vsel %vm86, %v2066, 0
    %v2102 = vsel %vm86, %v2067, 0
    %v2105 = vsel %vm86, %v2068, 0
    %v2108 = vsel %vm86, %v2069, 0
    %v2111 = vsel %vm86, %v2070, 0
    %v2114 = vsel %vm86, %v2071, 0
    %v2117 = vsel %vm86, %v2072, 0
    %v2120 = vsel %vm86, %v2073, 0
    %v2123 = vsel %vm86, %v2074, 0
    %v2126 = vsel %vm86, %v2075, 0
    %2128 = vmatpush.msra.mxu0 0.0
    %2129 = vmatpush.msra.mxu0 0.0
    %2130 = vmatpush.msra.mxu0 0.0
    %2131 = vmatpush.msra.mxu0 0.0
    %2132 = vmatpush.msra.mxu0 0.0
    %2133 = vmatpush.msra.mxu0 0.0
    %2134 = vmatpush.msra.mxu0 0.0
    %2135 = vmatpush.msra.mxu0 0.0
    %2136 = vmatpush.msra.mxu0 0.0
    %2137 = vmatpush.msra.mxu0 0.0
    %2138 = vmatpush.msra.mxu0 0.0
    %2139 = vmatpush.msra.mxu0 0.0
    %2140 = vmatpush.msra.mxu0 %v2079
    %2141 = vmatpush.msra.mxu0 %v2078
    %2142 = vmatpush.msra.mxu0 %v2077
    %2143 = vmatpush.msra.mxu0 %v2076
    %2144 = vmatmul.f32.gmra.mxu0 %v2081
    %v2145 = vpop.f32.mrf.mxu0
    %v2146 = vadd.f32 0.0, %v2145
    %2147 = vmatmul.f32.gmra.mxu0 %v2084
    %v2148 = vpop.f32.mrf.mxu0
    %v2149 = vadd.f32 0.0, %v2148
    %2150 = vmatmul.f32.gmra.mxu0 %v2087
    %v2151 = vpop.f32.mrf.mxu0
    %v2152 = vadd.f32 0.0, %v2151
    %2153 = vmatmul.f32.gmra.mxu0 %v2090
    %v2154 = vpop.f32.mrf.mxu0
    %v2155 = vadd.f32 0.0, %v2154
    %2156 = vmatmul.f32.gmra.mxu0 %v2093
    %v2157 = vpop.f32.mrf.mxu0
    %v2158 = vadd.f32 0.0, %v2157
    %2159 = vmatmul.f32.gmra.mxu0 %v2096
    %v2160 = vpop.f32.mrf.mxu0
    %v2161 = vadd.f32 0.0, %v2160
    %2162 = vmatmul.f32.gmra.mxu0 %v2099
    %v2163 = vpop.f32.mrf.mxu0
    %v2164 = vadd.f32 0.0, %v2163
    %2165 = vmatmul.f32.gmra.mxu0 %v2102
    %v2166 = vpop.f32.mrf.mxu0
    %v2167 = vadd.f32 0.0, %v2166
    %2168 = vmatmul.f32.gmra.mxu0 %v2105
    %v2169 = vpop.f32.mrf.mxu0
    %v2170 = vadd.f32 0.0, %v2169
    %2171 = vmatmul.f32.gmra.mxu0 %v2108
    %v2172 = vpop.f32.mrf.mxu0
    %v2173 = vadd.f32 0.0, %v2172
    %2174 = vmatmul.f32.gmra.mxu0 %v2111
    %v2175 = vpop.f32.mrf.mxu0
    %v2176 = vadd.f32 0.0, %v2175
    %2177 = vmatmul.f32.gmra.mxu0 %v2114
    %v2178 = vpop.f32.mrf.mxu0
    %v2179 = vadd.f32 0.0, %v2178
    %2180 = vmatmul.f32.gmra.mxu0 %v2117
    %v2181 = vpop.f32.mrf.mxu0
    %v2182 = vadd.f32 0.0, %v2181
    %2183 = vmatmul.f32.gmra.mxu0 %v2120
    %v2184 = vpop.f32.mrf.mxu0
    %v2185 = vadd.f32 0.0, %v2184
    %2186 = vmatmul.f32.gmra.mxu0 %v2123
    %v2187 = vpop.f32.mrf.mxu0
    %v2188 = vadd.f32 0.0, %v2187
    %2189 = vmatmul.f32.gmra.mxu0 %v2126
    %v2190 = vpop.f32.mrf.mxu0
    %v2191 = vadd.f32 0.0, %v2190
    %2192 = vdwg.mxu0
    %v2193 = vadd.f32 %v2044, %v2146
    %v2194 = vadd.f32 %v2045, %v2149
    %v2195 = vadd.f32 %v2046, %v2152
    %v2196 = vadd.f32 %v2047, %v2155
    %v2197 = vadd.f32 %v2048, %v2158
    %v2198 = vadd.f32 %v2049, %v2161
    %v2199 = vadd.f32 %v2050, %v2164
    %v2200 = vadd.f32 %v2051, %v2167
    %v2201 = vadd.f32 %v2052, %v2170
    %v2202 = vadd.f32 %v2053, %v2173
    %v2203 = vadd.f32 %v2054, %v2176
    %v2204 = vadd.f32 %v2055, %v2179
    %v2205 = vadd.f32 %v2056, %v2182
    %v2206 = vadd.f32 %v2057, %v2185
    %v2207 = vadd.f32 %v2058, %v2188
    %v2208 = vadd.f32 %v2059, %v2191
    %v2209 = vperm.slane %v488, 2
    %v2210 = vperm.slane %v489, 2
    %v2211 = vmul.f32 %v2193, %v2209
    %v2212 = vmul.f32 %v2194, %v2209
    %v2213 = vmul.f32 %v2195, %v2209
    %v2214 = vmul.f32 %v2196, %v2209
    %v2215 = vmul.f32 %v2197, %v2209
    %v2216 = vmul.f32 %v2198, %v2209
    %v2217 = vmul.f32 %v2199, %v2209
    %v2218 = vmul.f32 %v2200, %v2209
    %v2219 = vmul.f32 %v2201, %v2210
    %v2220 = vmul.f32 %v2202, %v2210
    %v2221 = vmul.f32 %v2203, %v2210
    %v2222 = vmul.f32 %v2204, %v2210
    %v2223 = vmul.f32 %v2205, %v2210
    %v2224 = vmul.f32 %v2206, %v2210
    %v2225 = vmul.f32 %v2207, %v2210
    %v2226 = vmul.f32 %v2208, %v2210
    %v2227 = vperm.slane %v488, 3
    %v2228 = vperm.slane %v489, 3
    %v2229 = vadd.f32 %v2211, %v2227
    %v2230 = vadd.f32 %v2212, %v2227
    %v2231 = vadd.f32 %v2213, %v2227
    %v2232 = vadd.f32 %v2214, %v2227
    %v2233 = vadd.f32 %v2215, %v2227
    %v2234 = vadd.f32 %v2216, %v2227
    %v2235 = vadd.f32 %v2217, %v2227
    %v2236 = vadd.f32 %v2218, %v2227
    %v2237 = vadd.f32 %v2219, %v2228
    %v2238 = vadd.f32 %v2220, %v2228
    %v2239 = vadd.f32 %v2221, %v2228
    %v2240 = vadd.f32 %v2222, %v2228
    %v2241 = vadd.f32 %v2223, %v2228
    %v2242 = vadd.f32 %v2224, %v2228
    %v2243 = vadd.f32 %v2225, %v2228
    %v2244 = vadd.f32 %v2226, %v2228
    %v2245 = vmax.f32 %v2229, 0.0
    %v2246 = vmax.f32 %v2230, 0.0
    %v2247 = vmax.f32 %v2231, 0.0
    %v2248 = vmax.f32 %v2232, 0.0
    %v2249 = vmax.f32 %v2233, 0.0
    %v2250 = vmax.f32 %v2234, 0.0
    %v2251 = vmax.f32 %v2235, 0.0
    %v2252 = vmax.f32 %v2236, 0.0
    %v2253 = vmax.f32 %v2237, 0.0
    %v2254 = vmax.f32 %v2238, 0.0
    %v2255 = vmax.f32 %v2239, 0.0
    %v2256 = vmax.f32 %v2240, 0.0
    %v2257 = vmax.f32 %v2241, 0.0
    %v2258 = vmax.f32 %v2242, 0.0
    %v2259 = vmax.f32 %v2243, 0.0
    %v2260 = vmax.f32 %v2244, 0.0
    %2261 = vst.msk [vmem:[#allocation3] sm:$0xff] %vm86, %v2245
    %2262 = vst.msk [vmem:[#allocation3 + $0x8] sm:$0xff] %vm86, %v2246
    %2263 = vst.msk [vmem:[#allocation3 + $0x10] sm:$0xff] %vm86, %v2247
    %2264 = vst.msk [vmem:[#allocation3 + $0x18] sm:$0xff] %vm86, %v2248
    %2265 = vst.msk [vmem:[#allocation3 + $0x20] sm:$0xff] %vm86, %v2249
    %2266 = vst.msk [vmem:[#allocation3 + $0x28] sm:$0xff] %vm86, %v2250
    %2267 = vst.msk [vmem:[#allocation3 + $0x30] sm:$0xff] %vm86, %v2251
    %2268 = vst.msk [vmem:[#allocation3 + $0x38] sm:$0xff] %vm86, %v2252
    %2269 = vst.msk [vmem:[#allocation3 + $0x40] sm:$0xff] %vm86, %v2253
    %2270 = vst.msk [vmem:[#allocation3 + $0x48] sm:$0xff] %vm86, %v2254
    %2271 = vst.msk [vmem:[#allocation3 + $0x50] sm:$0xff] %vm86, %v2255
    %2272 = vst.msk [vmem:[#allocation3 + $0x58] sm:$0xff] %vm86, %v2256
    %2273 = vst.msk [vmem:[#allocation3 + $0x60] sm:$0xff] %vm86, %v2257
    %2274 = vst.msk [vmem:[#allocation3 + $0x68] sm:$0xff] %vm86, %v2258
    %2275 = vst.msk [vmem:[#allocation3 + $0x70] sm:$0xff] %vm86, %v2259
    %2276 = vst.msk [vmem:[#allocation3 + $0x78] sm:$0xff] %vm86, %v2260
    // Predicated region
    $region18: #{forward.1} parent=1 // pred_check
      _
    $region19: #{forward.1} parent=1 // pred_check_branch
      %2278 = sbr.rel (0) target = $region21
    $region20: #{forward.1} parent=1 // pred_region
      %2280 = vsyncadd [#allocation4], 0
      %s2281 = sshll.u32 [#allocation3], 4
      %s2282 = int_to_ptr.vmem [resolvable:$true] %s2281
      %s2283 = sshll.u32 %s4, 4
      %s2284 = int_to_ptr.hbm [resolvable:$true] %s2283
      %2289 = dma.vmem_to_hbm [thread:$0]  %s2282, 2048, %s2284, [#allocation4], 128, 128, 8
    $region21: #{forward.1} parent=1 // pred_fallthru
      _
    // Predicated region
    $region22: #{forward.1} parent=1 // pred_check
      _
    $region23: #{forward.1} parent=1 // pred_check_branch
      %2291 = sbr.rel (0) target = $region25
    $region24: #{forward.1} parent=1 // pred_region
      %2293 = dma.done [#allocation4], 2048
    $region25: #{forward.1} parent=1 // pred_fallthru
      _
    %2294 = vsyncpa [#allocation4], 1

</llo_original>
